<compile_context>
chip_gen: v7x
topology: tpu7x:2x2x1
jax: 0.10.0
libtpu: 0.0.40
codegen_flags: <defaults>
</compile_context>

<pallas_src>
import numpy as np
import jax
import jax.numpy as jnp
from jax.experimental import pallas as pl
from jax.experimental.pallas import tpu as pltpu

# ----------------------------- config ---------------------------------------
H = 32            # config['mpn_size']
MLP_H = 32        # config['mlp_size']
BS_OUTDIM = 5     # config['bs_outdim'] (== len(BOND_FLOATS))
N_ATOM_FEAT = 16  # config['n_atom_feat']
LANE = 128        # TPU lane width: kernel outputs are padded to this
SUB = 16          # sublane alignment for row axes (bf16 tile = 16 rows)

_WEIGHT_NAMES = ("enc_w", "enc_b", "w_vvc",
                 "bond_w1a", "bond_w1b", "bond_b1", "bond_w2p", "bond_b2p",
                 "am_w1", "am_b1", "am_w2p", "am_b2p")


def _round_up(x, m):
    return (x + m - 1) // m * m


# ----------------------------- pallas_call wrapper ----------------------------
def _fused_sequence(pk, f_all, oh_all, n_pad, m_pad, nb_pad):
    """Runs the whole edit sequence in one pallas_call, grid=(T,)."""
    T = f_all.shape[0]
    rows = nb_pad + n_pad + m_pad
    f32, bf16 = jnp.float32, jnp.bfloat16

    def kernel(oh_ref, f_ref,
               enc_w, enc_b, w_vvc,
               b_w1a, b_w1b, b_b1, b_w2, b_b2,
               am_w1, am_b1, am_w2, am_b2,
               cmol_ref, logits_ref, ha_scr):
        t = pl.program_id(0)

        # ha starts at zero (MultiEdit passes ha=None on the first step).
        @pl.when(t == 0)
        def _():
            ha_scr[...] = jnp.zeros_like(ha_scr)

        # ---- encoder stand-in: c_atom = relu(f_atoms @ W_enc + b_enc) ------
        c_atom = jnp.maximum(
            jnp.dot(f_ref[0], enc_w[...], preferred_element_type=f32)
            + enc_b[...], 0.0)                                    # [N, H] f32
        c_bf = c_atom.astype(bf16)

        # ---- fused ha update: relu([ha_prev | c_atom] @ [[W_vv],[W_vc]]) ---
        hc = jnp.concatenate([ha_scr[...], c_bf], axis=-1)        # [N, 2H] bf16
        ha_new = jnp.maximum(
            jnp.dot(hc, w_vvc[...], preferred_element_type=f32), 0.0)
        ha_bf = ha_new.astype(bf16)
        ha_scr[...] = ha_bf                                       # bf16 carry

        # ---- ONE merged one-hot matmul: [seg; gs; ge] @ ha ------------------
        pooled = jnp.dot(oh_ref[0], ha_bf,
                         preferred_element_type=f32)              # [M+2NB, H]
        hm = pooled[:m_pad]                                       # [M, H]
        gsha = pooled[m_pad:m_pad + nb_pad]                       # [NB, H]
        geha = pooled[m_pad + nb_pad:]                            # [NB, H]

        # ---- c_mol is only consumed at step 0: gated matmul + single store -
        @pl.when(t == 0)
        def _():
            c_mol = jnp.dot(oh_ref[0, :m_pad, :], c_bf,
                            preferred_element_type=f32)           # [M, H]
            cmol_ref[...] = jnp.concatenate(
                [c_mol, jnp.zeros((m_pad, LANE - H), f32)],
                axis=-1).astype(bf16)

        # ---- bond_score MLP (split first layer: no lane concat) ------------
        bh = jnp.maximum(
            jnp.dot(gsha.astype(bf16), b_w1a[...], preferred_element_type=f32)
            + jnp.dot(geha.astype(bf16), b_w1b[...], preferred_element_type=f32)
            + b_b1[...], 0.0)
        bond_logits = (jnp.dot(bh.astype(bf16), b_w2[...],
                               preferred_element_type=f32) + b_b2[...])

        # ---- unimol + done as ONE block-diagonal MLP -------------------------
        #   rows = [ha ; hm];  col 0 = unimol logit, col 1 = done logit
        am_rows = jnp.concatenate([ha_bf, hm.astype(bf16)], axis=0)
        rh = jnp.maximum(
            jnp.dot(am_rows, am_w1[...], preferred_element_type=f32)
            + am_b1[...], 0.0)
        am_logits = (jnp.dot(rh.astype(bf16), am_w2[...],
                             preferred_element_type=f32) + am_b2[...])

        # ---- two direct, sublane-aligned, lane-dense stores (no row concat) -
        logits_ref[0, :nb_pad, :] = bond_logits.astype(bf16)
        logits_ref[0, nb_pad:, :] = am_logits.astype(bf16)

    def t_spec(shape):
        return pl.BlockSpec((1,) + tuple(shape[1:]),
                            lambda t: (t,) + (0,) * (len(shape) - 1))

    def w_spec(x):
        return pl.BlockSpec(tuple(x.shape), lambda t: (0,) * x.ndim)

    weights = [pk[name] for name in _WEIGHT_NAMES]
    in_specs = ([t_spec(oh_all.shape), t_spec(f_all.shape)]
                + [w_spec(w) for w in weights])

    out_shape = (jax.ShapeDtypeStruct((m_pad, LANE), jnp.bfloat16),
                 jax.ShapeDtypeStruct((T, rows, LANE), jnp.bfloat16))
    out_specs = (pl.BlockSpec((m_pad, LANE), lambda t: (0, 0)),
                 pl.BlockSpec((1, rows, LANE), lambda t: (t, 0, 0)))

    per_step = 2 * (
        n_pad * N_ATOM_FEAT * H + n_pad * 2 * H * H
        + (m_pad + 2 * nb_pad) * n_pad * H
        + 2 * nb_pad * H * MLP_H + nb_pad * MLP_H * LANE
        + (n_pad + m_pad) * H * 2 * MLP_H + (n_pad + m_pad) * 2 * MLP_H * LANE)
    flops = T * per_step + 2 * m_pad * n_pad * H
    bytes_accessed = int(
        f_all.nbytes + oh_all.nbytes + sum(w.nbytes for w in weights)
        + (m_pad * LANE + T * rows * LANE) * 2)

    return pl.pallas_call(
        kernel,
        out_shape=out_shape,
        grid=(T,),
        in_specs=in_specs,
        out_specs=out_specs,
        scratch_shapes=[pltpu.VMEM((n_pad, H), jnp.bfloat16)],
        compiler_params=pltpu.CompilerParams(
            dimension_semantics=("arbitrary",)),   # sequential ha carry
        cost_estimate=pl.CostEstimate(flops=int(flops), transcendentals=0,
                                      bytes_accessed=bytes_accessed),
    )(oh_all, f_all, *weights)


# ----------------------------- parameters ------------------------------------
def init_params(key):
    ks = jax.random.split(key, 14)
    s = 0.1

    def rnd(k, shape):
        return s * jax.random.normal(k, shape, dtype=jnp.float32)

    return {
        # encoder stand-in
        "enc_w": rnd(ks[0], (N_ATOM_FEAT, H)),
        "enc_b": rnd(ks[1], (1, H)),
        # W_vv initialized as identity (nn.init.eye_), W_vc default init; no bias
        "w_vv": jnp.eye(H, dtype=jnp.float32),
        "w_vc": rnd(ks[2], (H, H)),
        # bond_score: MLP(2H -> mlp_size -> bs_outdim)
        "bond_w1": rnd(ks[3], (2 * H, MLP_H)),
        "bond_b1": rnd(ks[4], (1, MLP_H)),
        "bond_w2": rnd(ks[5], (MLP_H, BS_OUTDIM)),
        "bond_b2": rnd(ks[6], (1, BS_OUTDIM)),
        # unimol_score: MLP(H -> mlp_size -> 1)   (use_h_labels=True path)
        "uni_w1": rnd(ks[7], (H, MLP_H)),
        "uni_b1": rnd(ks[8], (1, MLP_H)),
        "uni_w2": rnd(ks[9], (MLP_H, 1)),
        "uni_b2": jnp.zeros((1, 1), jnp.float32),
        # done_score: MLP(H -> mlp_size -> 1)
        "done_w1": rnd(ks[10], (H, MLP_H)),
        "done_b1": rnd(ks[11], (1, MLP_H)),
        "done_w2": rnd(ks[12], (MLP_H, 1)),
        "done_b2": jnp.zeros((1, 1), jnp.float32),
    }


def pack_params(p):
    """Kernel-layout weights: bf16 MXU inputs, f32 biases, 128-lane padded
    second layers, fused ha-update weight, split bond first layer, and
    unimol+done merged into a block-diagonal MLP."""
    bf16 = jnp.bfloat16

    def pad_lanes(x):
        return jnp.pad(x, ((0, 0), (0, LANE - x.shape[1])))

    am_w2 = jnp.zeros((2 * MLP_H, LANE), jnp.float32)
    am_w2 = am_w2.at[:MLP_H, 0:1].set(p["uni_w2"])
    am_w2 = am_w2.at[MLP_H:, 1:2].set(p["done_w2"])
    am_b2 = jnp.zeros((1, LANE), jnp.float32)
    am_b2 = am_b2.at[:, 0:1].set(p["uni_b2"])
    am_b2 = am_b2.at[:, 1:2].set(p["done_b2"])

    return {
        "enc_w": p["enc_w"].astype(bf16),
        "enc_b": p["enc_b"],
        # ha_new = [ha_prev | c_atom] @ [[w_vv], [w_vc]]
        "w_vvc": jnp.concatenate([p["w_vv"], p["w_vc"]], axis=0).astype(bf16),
        "bond_w1a": p["bond_w1"][:H].astype(bf16),
        "bond_w1b": p["bond_w1"][H:].astype(bf16),
        "bond_b1": p["bond_b1"],
        "bond_w2p": pad_lanes(p["bond_w2"]).astype(bf16),
        "bond_b2p": pad_lanes(p["bond_b2"]),
        "am_w1": jnp.concatenate([p["uni_w1"], p["done_w1"]], axis=1).astype(bf16),
        "am_b1": jnp.concatenate([p["uni_b1"], p["done_b1"]], axis=1),
        "am_w2p": am_w2.astype(bf16),
        "am_b2p": am_b2,
    }


# ----------------------------- host-side prep --------------------------------
def _prepare_sequence(prod_seq_inputs):
    """Pads once per sequence, pre-casts to bf16 and builds ONE stacked
    one-hot matrix [seg ; gather_start ; gather_end] per step."""
    n_atoms = int(prod_seq_inputs[0][0][0].shape[0])
    n_pad = _round_up(n_atoms, SUB)
    m_pad = _round_up(max(len(s[1][0]) for s in prod_seq_inputs), SUB)
    nb_pad = _round_up(max(int(s[0][1].shape[0]) for s in prod_seq_inputs), SUB)

    f_list, oh_list = [], []
    for (f_atoms, bond_index), (atom_scope, _bond_scope) in prod_seq_inputs:
        # mirrors `assert c_atom.shape == ha.shape` in the original module
        assert int(f_atoms.shape[0]) == n_atoms
        f_np = np.asarray(f_atoms, np.float32)
        f_pad = np.zeros((n_pad, f_np.shape[1]), np.float32)
        f_pad[:n_atoms] = f_np
        f_list.append(f_pad)

        oh = np.zeros((m_pad + 2 * nb_pad, n_pad), np.float32)
        for m, (st, le) in enumerate(atom_scope):
            oh[m, st:st + le] = 1.0                       # scope-sum rows
        bi = np.asarray(bond_index)
        nb = bi.shape[0]
        oh[m_pad + np.arange(nb), bi[:, 0]] = 1.0         # bond-start gather
        oh[m_pad + nb_pad + np.arange(nb), bi[:, 1]] = 1.0  # bond-end gather
        oh_list.append(oh)

    f_all = jnp.asarray(np.stack(f_list), jnp.bfloat16)   # [T, n_pad, F] bf16
    oh_all = jnp.asarray(np.stack(oh_list), jnp.bfloat16)  # one-hot exact in bf16
    return f_all, oh_all, n_pad, m_pad, nb_pad


# ----------------------------- model forward ---------------------------------
def multi_edit_forward(params, prod_seq_inputs):
    """Mirrors MultiEdit.forward (use_h_labels=True, no attention)."""
    pk = pack_params(params)
    f_all, oh_all, n_pad, m_pad, nb_pad = _prepare_sequence(prod_seq_inputs)

    cmol_pad, slab = _fused_sequence(pk, f_all, oh_all, n_pad, m_pad, nb_pad)
    # slab[t]: rows [0:nb_pad)            -> bond logits in cols 0:BS_OUTDIM
    #          rows [nb_pad:nb_pad+n_pad) -> unimol logit in col 0
    #          rows [nb_pad+n_pad: ...)   -> done logit in col 1
    slab = slab.astype(jnp.float32)

    atom_scope0 = prod_seq_inputs[0][1][0]
    c_mol = cmol_pad[:len(atom_scope0), :H].astype(jnp.float32)

    # ragged per-molecule concat (host-side glue, use_h_labels=True path)
    seq_edit_logits = []
    for t, (_, (atom_scope, bond_scope)) in enumerate(prod_seq_inputs):
        step_logits = []
        for idx, ((st_a, le_a), (st_b, le_b)) in enumerate(zip(atom_scope, bond_scope)):
            bond_part = slab[t, st_b:st_b + le_b, :BS_OUTDIM].reshape(-1)
            uni_part = slab[t, nb_pad + st_a: nb_pad + st_a + le_a, 0]
            done_part = slab[t, nb_pad + n_pad + idx, 1:2]
            step_logits.append(
                jnp.concatenate([bond_part, uni_part, done_part], axis=-1))
        seq_edit_logits.append(step_logits)
    return c_mol, seq_edit_logits


# ----------------------------- pure-JAX reference ----------------------------
def _reference_forward(params, prod_seq_inputs):
    def mlp(x, w1, b1, w2, b2):
        return jnp.maximum(x @ w1 + b1, 0.0) @ w2 + b2

    ha, c_mol0, seq_edit_logits = None, None, []
    for t, ((f_atoms, bond_index), (atom_scope, bond_scope)) in enumerate(prod_seq_inputs):
        if ha is None:
            ha = jnp.zeros((f_atoms.shape[0], H), jnp.float32)
        c_atom = jnp.maximum(f_atoms @ params["enc_w"] + params["enc_b"], 0.0)
        c_mol = jnp.stack([c_atom[st:st + le].sum(0) for st, le in atom_scope])
        ha = jnp.maximum(ha @ params["w_vv"] + c_atom @ params["w_vc"], 0.0)
        hm = jnp.stack([ha[st:st + le].sum(0) for st, le in atom_scope])
        bond_x = jnp.concatenate([ha[bond_index[:, 0]], ha[bond_index[:, 1]]], axis=-1)
        bond_logits = mlp(bond_x, params["bond_w1"], params["bond_b1"],
                          params["bond_w2"], params["bond_b2"])
        uni = mlp(ha, params["uni_w1"], params["uni_b1"],
                  params["uni_w2"], params["uni_b2"])
        done = mlp(hm, params["done_w1"], params["done_b1"],
                   params["done_w2"], params["done_b2"])
        step_logits = [
            jnp.concatenate([bond_logits[st_b:st_b + le_b].reshape(-1),
                             uni[st_a:st_a + le_a].reshape(-1), done[i]], axis=-1)
            for i, ((st_a, le_a), (st_b, le_b)) in enumerate(zip(atom_scope, bond_scope))]
        if t == 0:
            c_mol0 = c_mol
        seq_edit_logits.append(step_logits)
    return c_mol0, seq_edit_logits


# ----------------------------- main -------------------------------------------
if __name__ == "__main__":
    key = jax.random.PRNGKey(0)
    params = init_params(key)

    # synthetic batch: 2 molecules, 5 + 7 atoms, 4 + 6 bonds, 2 edit steps
    atom_scope = [(0, 5), (5, 7)]
    bond_scope = [(0, 4), (4, 6)]
    n_atoms = 12
    bond_index = jnp.array(
        [[0, 1], [1, 2], [2, 3], [3, 4],                       # molecule 0
         [5, 6], [6, 7], [7, 8], [8, 9], [9, 10], [10, 11]],   # molecule 1
        dtype=jnp.int32)

    max_seq_len = 2
    prod_seq_inputs = []
    for step in range(max_seq_len):
        f_atoms = jax.random.normal(jax.random.fold_in(key, step + 1),
                                    (n_atoms, N_ATOM_FEAT), jnp.float32)
        prod_seq_inputs.append(((f_atoms, bond_index), (atom_scope, bond_scope)))

    c_mol, seq_edit_logits = multi_edit_forward(params, prod_seq_inputs)

    jax.block_until_ready(c_mol)
    for step_logits in seq_edit_logits:
        for logits in step_logits:
            jax.block_until_ready(logits)

    # shape sanity: per-molecule logit length = n_bonds*bs_outdim + n_atoms + 1
    assert seq_edit_logits[0][0].shape[0] == 4 * BS_OUTDIM + 5 + 1
    assert seq_edit_logits[0][1].shape[0] == 6 * BS_OUTDIM + 7 + 1
    assert c_mol.shape == (2, H)

    # numeric sanity vs pure-JAX f32 reference (bf16 MXU inputs + bf16 outputs
    # -> loose tolerance)
    c_mol_ref, seq_ref = _reference_forward(params, prod_seq_inputs)
    np.testing.assert_allclose(np.asarray(c_mol), np.asarray(c_mol_ref),
                               rtol=0.2, atol=0.08)
    for t in range(max_seq_len):
        for i in range(len(atom_scope)):
            np.testing.assert_allclose(np.asarray(seq_edit_logits[t][i]),
                                        np.asarray(seq_ref[t][i]),
                                        rtol=0.2, atol=0.08)

    print("KERNEL_OK")
</pallas_src>

<mosaic_0001>
module attributes {stable_mosaic.version = 11 : i64} {
  func.func @kernel(%arg0: i32, %arg1: memref<1x48x16xbf16, #tpu.memory_space<vmem>>, %arg2: memref<1x16x16xbf16, #tpu.memory_space<vmem>>, %arg3: memref<16x32xbf16, #tpu.memory_space<vmem>>, %arg4: memref<1x32xf32, #tpu.memory_space<vmem>>, %arg5: memref<64x32xbf16, #tpu.memory_space<vmem>>, %arg6: memref<32x32xbf16, #tpu.memory_space<vmem>>, %arg7: memref<32x32xbf16, #tpu.memory_space<vmem>>, %arg8: memref<1x32xf32, #tpu.memory_space<vmem>>, %arg9: memref<32x128xbf16, #tpu.memory_space<vmem>>, %arg10: memref<1x128xf32, #tpu.memory_space<vmem>>, %arg11: memref<32x64xbf16, #tpu.memory_space<vmem>>, %arg12: memref<1x64xf32, #tpu.memory_space<vmem>>, %arg13: memref<64x128xbf16, #tpu.memory_space<vmem>>, %arg14: memref<1x128xf32, #tpu.memory_space<vmem>>, %arg15: memref<16x128xbf16, #tpu.memory_space<vmem>>, %arg16: memref<1x48x128xbf16, #tpu.memory_space<vmem>>, %arg17: memref<16x32xbf16, #tpu.memory_space<vmem>>) attributes {dimension_semantics = [#tpu.dimension_semantics<arbitrary>], iteration_bounds = array<i64: 2>, scalar_prefetch = 0 : i64, scratch_operands = 1 : i64, tpu.core_type = #tpu.core_type<tc>, window_params = [{transform_indices = @transform_0, window_bounds = array<i64: 1, 48, 16>}, {transform_indices = @transform_1, window_bounds = array<i64: 1, 16, 16>}, {pipeline_mode = #tpu.pipeline_mode<synchronous>, transform_indices = @transform_2, window_bounds = array<i64: 16, 32>}, {pipeline_mode = #tpu.pipeline_mode<synchronous>, transform_indices = @transform_3, window_bounds = array<i64: 1, 32>}, {pipeline_mode = #tpu.pipeline_mode<synchronous>, transform_indices = @transform_4, window_bounds = array<i64: 64, 32>}, {pipeline_mode = #tpu.pipeline_mode<synchronous>, transform_indices = @transform_5, window_bounds = array<i64: 32, 32>}, {pipeline_mode = #tpu.pipeline_mode<synchronous>, transform_indices = @transform_6, window_bounds = array<i64: 32, 32>}, {pipeline_mode = #tpu.pipeline_mode<synchronous>, transform_indices = @transform_7, window_bounds = array<i64: 1, 32>}, {pipeline_mode = #tpu.pipeline_mode<synchronous>, transform_indices = @transform_8, window_bounds = array<i64: 32, 128>}, {pipeline_mode = #tpu.pipeline_mode<synchronous>, transform_indices = @transform_9, window_bounds = array<i64: 1, 128>}, {pipeline_mode = #tpu.pipeline_mode<synchronous>, transform_indices = @transform_10, window_bounds = array<i64: 32, 64>}, {pipeline_mode = #tpu.pipeline_mode<synchronous>, transform_indices = @transform_11, window_bounds = array<i64: 1, 64>}, {pipeline_mode = #tpu.pipeline_mode<synchronous>, transform_indices = @transform_12, window_bounds = array<i64: 64, 128>}, {pipeline_mode = #tpu.pipeline_mode<synchronous>, transform_indices = @transform_13, window_bounds = array<i64: 1, 128>}, {pipeline_mode = #tpu.pipeline_mode<synchronous>, transform_indices = @transform_14, window_bounds = array<i64: 16, 128>}, {transform_indices = @transform_15, window_bounds = array<i64: 1, 48, 128>}]} {
    %c0_i32 = arith.constant 0 : i32
    %0 = arith.cmpi eq, %arg0, %c0_i32 : i32
    %1 = arith.extui %0 : i1 to i32
    %c0_i32_0 = arith.constant 0 : i32
    %2 = arith.cmpi ne, %1, %c0_i32_0 : i32
    scf.if %2 {
      %cst_52 = arith.constant 0.000000e+00 : bf16
      %71 = vector.broadcast %cst_52 : bf16 to vector<16x32xbf16>
      %c0_53 = arith.constant 0 : index
      %c0_54 = arith.constant 0 : index
      %72 = vector.load %arg17[%c0_53, %c0_54] : memref<16x32xbf16, #tpu.memory_space<vmem>>, vector<16x32xbf16>
      tpu.vector_store %arg17[%c0_53, %c0_54], %71 {strides = array<i32>} : memref<16x32xbf16, #tpu.memory_space<vmem>>, vector<16x32xbf16>,
    } else {
    }
    %c0 = arith.constant 0 : index
    %c0_1 = arith.constant 0 : index
    %c0_2 = arith.constant 0 : index
    %3 = vector.load %arg2[%c0, %c0_1, %c0_2] : memref<1x16x16xbf16, #tpu.memory_space<vmem>>, vector<1x16x16xbf16>
    %4 = vector.shape_cast %3 : vector<1x16x16xbf16> to vector<16x16xbf16>
    %c0_3 = arith.constant 0 : index
    %c0_4 = arith.constant 0 : index
    %5 = vector.load %arg3[%c0_3, %c0_4] : memref<16x32xbf16, #tpu.memory_space<vmem>>, vector<16x32xbf16>
    %cst = arith.constant dense<0.000000e+00> : vector<16x32xf32>
    %6 = tpu.matmul %4, %5, %cst {dimension_numbers = #tpu.dot_dimension_numbers<[1], [0], [0], [1], [0, 0, 1, 1], [], []>} : vector<16x16xbf16>, vector<16x32xbf16>, vector<16x32xf32> -> vector<16x32xf32>
    %c0_5 = arith.constant 0 : index
    %c0_6 = arith.constant 0 : index
    %7 = vector.load %arg4[%c0_5, %c0_6] : memref<1x32xf32, #tpu.memory_space<vmem>>, vector<1x32xf32>
    %8 = vector.broadcast %7 : vector<1x32xf32> to vector<16x32xf32>
    %9 = arith.addf %6, %8 : vector<16x32xf32>
    %cst_7 = arith.constant 0.000000e+00 : f32
    %10 = vector.broadcast %cst_7 : f32 to vector<16x32xf32>
    %11 = arith.maximumf %9, %10 : vector<16x32xf32>
    %12 = arith.truncf %11 : vector<16x32xf32> to vector<16x32xbf16>
    %c0_8 = arith.constant 0 : index
    %c0_9 = arith.constant 0 : index
    %13 = vector.load %arg17[%c0_8, %c0_9] : memref<16x32xbf16, #tpu.memory_space<vmem>>, vector<16x32xbf16>
    %14 = tpu.concatenate %13, %12 in 1 : vector<16x32xbf16>, vector<16x32xbf16> -> vector<16x64xbf16>
    %c0_10 = arith.constant 0 : index
    %c0_11 = arith.constant 0 : index
    %15 = vector.load %arg5[%c0_10, %c0_11] : memref<64x32xbf16, #tpu.memory_space<vmem>>, vector<64x32xbf16>
    %cst_12 = arith.constant dense<0.000000e+00> : vector<16x32xf32>
    %16 = tpu.matmul %14, %15, %cst_12 {dimension_numbers = #tpu.dot_dimension_numbers<[1], [0], [0], [1], [0, 0, 1, 1], [], []>} : vector<16x64xbf16>, vector<64x32xbf16>, vector<16x32xf32> -> vector<16x32xf32>
    %cst_13 = arith.constant 0.000000e+00 : f32
    %17 = vector.broadcast %cst_13 : f32 to vector<16x32xf32>
    %18 = arith.maximumf %16, %17 : vector<16x32xf32>
    %19 = arith.truncf %18 : vector<16x32xf32> to vector<16x32xbf16>
    %c0_14 = arith.constant 0 : index
    %c0_15 = arith.constant 0 : index
    %20 = vector.load %arg17[%c0_14, %c0_15] : memref<16x32xbf16, #tpu.memory_space<vmem>>, vector<16x32xbf16>
    tpu.vector_store %arg17[%c0_14, %c0_15], %19 {strides = array<i32>} : memref<16x32xbf16, #tpu.memory_space<vmem>>, vector<16x32xbf16>,
    %c0_16 = arith.constant 0 : index
    %c0_17 = arith.constant 0 : index
    %c0_18 = arith.constant 0 : index
    %21 = vector.load %arg1[%c0_16, %c0_17, %c0_18] : memref<1x48x16xbf16, #tpu.memory_space<vmem>>, vector<1x48x16xbf16>
    %22 = vector.shape_cast %21 : vector<1x48x16xbf16> to vector<48x16xbf16>
    %cst_19 = arith.constant dense<0.000000e+00> : vector<48x32xf32>
    %23 = tpu.matmul %22, %19, %cst_19 {dimension_numbers = #tpu.dot_dimension_numbers<[1], [0], [0], [1], [0, 0, 1, 1], [], []>} : vector<48x16xbf16>, vector<16x32xbf16>, vector<48x32xf32> -> vector<48x32xf32>
    %24 = vector.extract_strided_slice %23 {offsets = [0, 0], sizes = [16, 32], strides = [1, 1]} : vector<48x32xf32> to vector<16x32xf32>
    %25 = vector.extract_strided_slice %23 {offsets = [16, 0], sizes = [16, 32], strides = [1, 1]} : vector<48x32xf32> to vector<16x32xf32>
    %26 = vector.extract_strided_slice %23 {offsets = [32, 0], sizes = [16, 32], strides = [1, 1]} : vector<48x32xf32> to vector<16x32xf32>
    %c0_i32_20 = arith.constant 0 : i32
    %27 = arith.cmpi eq, %arg0, %c0_i32_20 : i32
    %28 = arith.extui %27 : i1 to i32
    %c0_i32_21 = arith.constant 0 : i32
    %29 = arith.cmpi ne, %28, %c0_i32_21 : i32
    scf.if %29 {
      %c0_52 = arith.constant 0 : index
      %c0_53 = arith.constant 0 : index
      %c0_54 = arith.constant 0 : index
      %71 = vector.load %arg1[%c0_52, %c0_53, %c0_54] : memref<1x48x16xbf16, #tpu.memory_space<vmem>>, vector<1x16x16xbf16>
      %72 = vector.shape_cast %71 : vector<1x16x16xbf16> to vector<16x16xbf16>
      %cst_55 = arith.constant dense<0.000000e+00> : vector<16x32xf32>
      %73 = tpu.matmul %72, %12, %cst_55 {dimension_numbers = #tpu.dot_dimension_numbers<[1], [0], [0], [1], [0, 0, 1, 1], [], []>} : vector<16x16xbf16>, vector<16x32xbf16>, vector<16x32xf32> -> vector<16x32xf32>
      %cst_56 = arith.constant 0.000000e+00 : f32
      %74 = vector.broadcast %cst_56 : f32 to vector<16x96xf32>
      %75 = tpu.concatenate %73, %74 in 1 : vector<16x32xf32>, vector<16x96xf32> -> vector<16x128xf32>
      %76 = arith.truncf %75 : vector<16x128xf32> to vector<16x128xbf16>
      %c0_57 = arith.constant 0 : index
      %c0_58 = arith.constant 0 : index
      %77 = vector.load %arg15[%c0_57, %c0_58] : memref<16x128xbf16, #tpu.memory_space<vmem>>, vector<16x128xbf16>
      tpu.vector_store %arg15[%c0_57, %c0_58], %76 {strides = array<i32>} : memref<16x128xbf16, #tpu.memory_space<vmem>>, vector<16x128xbf16>,
    } else {
    }
    %30 = arith.truncf %25 : vector<16x32xf32> to vector<16x32xbf16>
    %c0_22 = arith.constant 0 : index
    %c0_23 = arith.constant 0 : index
    %31 = vector.load %arg6[%c0_22, %c0_23] : memref<32x32xbf16, #tpu.memory_space<vmem>>, vector<32x32xbf16>
    %cst_24 = arith.constant dense<0.000000e+00> : vector<16x32xf32>
    %32 = tpu.matmul %30, %31, %cst_24 {dimension_numbers = #tpu.dot_dimension_numbers<[1], [0], [0], [1], [0, 0, 1, 1], [], []>} : vector<16x32xbf16>, vector<32x32xbf16>, vector<16x32xf32> -> vector<16x32xf32>
    %33 = arith.truncf %26 : vector<16x32xf32> to vector<16x32xbf16>
    %c0_25 = arith.constant 0 : index
    %c0_26 = arith.constant 0 : index
    %34 = vector.load %arg7[%c0_25, %c0_26] : memref<32x32xbf16, #tpu.memory_space<vmem>>, vector<32x32xbf16>
    %cst_27 = arith.constant dense<0.000000e+00> : vector<16x32xf32>
    %35 = tpu.matmul %33, %34, %cst_27 {dimension_numbers = #tpu.dot_dimension_numbers<[1], [0], [0], [1], [0, 0, 1, 1], [], []>} : vector<16x32xbf16>, vector<32x32xbf16>, vector<16x32xf32> -> vector<16x32xf32>
    %36 = arith.addf %32, %35 : vector<16x32xf32>
    %c0_28 = arith.constant 0 : index
    %c0_29 = arith.constant 0 : index
    %37 = vector.load %arg8[%c0_28, %c0_29] : memref<1x32xf32, #tpu.memory_space<vmem>>, vector<1x32xf32>
    %38 = vector.broadcast %37 : vector<1x32xf32> to vector<16x32xf32>
    %39 = arith.addf %36, %38 : vector<16x32xf32>
    %cst_30 = arith.constant 0.000000e+00 : f32
    %40 = vector.broadcast %cst_30 : f32 to vector<16x32xf32>
    %41 = arith.maximumf %39, %40 : vector<16x32xf32>
    %42 = arith.truncf %41 : vector<16x32xf32> to vector<16x32xbf16>
    %c0_31 = arith.constant 0 : index
    %c0_32 = arith.constant 0 : index
    %43 = vector.load %arg9[%c0_31, %c0_32] : memref<32x128xbf16, #tpu.memory_space<vmem>>, vector<32x128xbf16>
    %cst_33 = arith.constant dense<0.000000e+00> : vector<16x128xf32>
    %44 = tpu.matmul %42, %43, %cst_33 {dimension_numbers = #tpu.dot_dimension_numbers<[1], [0], [0], [1], [0, 0, 1, 1], [], []>} : vector<16x32xbf16>, vector<32x128xbf16>, vector<16x128xf32> -> vector<16x128xf32>
    %c0_34 = arith.constant 0 : index
    %c0_35 = arith.constant 0 : index
    %45 = vector.load %arg10[%c0_34, %c0_35] : memref<1x128xf32, #tpu.memory_space<vmem>>, vector<1x128xf32>
    %46 = vector.broadcast %45 : vector<1x128xf32> to vector<16x128xf32>
    %47 = arith.addf %44, %46 : vector<16x128xf32>
    %48 = arith.truncf %24 : vector<16x32xf32> to vector<16x32xbf16>
    %49 = tpu.concatenate %19, %48 in 0 : vector<16x32xbf16>, vector<16x32xbf16> -> vector<32x32xbf16>
    %c0_36 = arith.constant 0 : index
    %c0_37 = arith.constant 0 : index
    %50 = vector.load %arg11[%c0_36, %c0_37] : memref<32x64xbf16, #tpu.memory_space<vmem>>, vector<32x64xbf16>
    %cst_38 = arith.constant dense<0.000000e+00> : vector<32x64xf32>
    %51 = tpu.matmul %49, %50, %cst_38 {dimension_numbers = #tpu.dot_dimension_numbers<[1], [0], [0], [1], [0, 0, 1, 1], [], []>} : vector<32x32xbf16>, vector<32x64xbf16>, vector<32x64xf32> -> vector<32x64xf32>
    %c0_39 = arith.constant 0 : index
    %c0_40 = arith.constant 0 : index
    %52 = vector.load %arg12[%c0_39, %c0_40] : memref<1x64xf32, #tpu.memory_space<vmem>>, vector<1x64xf32>
    %53 = vector.broadcast %52 : vector<1x64xf32> to vector<32x64xf32>
    %54 = arith.addf %51, %53 : vector<32x64xf32>
    %cst_41 = arith.constant 0.000000e+00 : f32
    %55 = vector.broadcast %cst_41 : f32 to vector<32x64xf32>
    %56 = arith.maximumf %54, %55 : vector<32x64xf32>
    %57 = arith.truncf %56 : vector<32x64xf32> to vector<32x64xbf16>
    %c0_42 = arith.constant 0 : index
    %c0_43 = arith.constant 0 : index
    %58 = vector.load %arg13[%c0_42, %c0_43] : memref<64x128xbf16, #tpu.memory_space<vmem>>, vector<64x128xbf16>
    %cst_44 = arith.constant dense<0.000000e+00> : vector<32x128xf32>
    %59 = tpu.matmul %57, %58, %cst_44 {dimension_numbers = #tpu.dot_dimension_numbers<[1], [0], [0], [1], [0, 0, 1, 1], [], []>} : vector<32x64xbf16>, vector<64x128xbf16>, vector<32x128xf32> -> vector<32x128xf32>
    %c0_45 = arith.constant 0 : index
    %c0_46 = arith.constant 0 : index
    %60 = vector.load %arg14[%c0_45, %c0_46] : memref<1x128xf32, #tpu.memory_space<vmem>>, vector<1x128xf32>
    %61 = vector.broadcast %60 : vector<1x128xf32> to vector<32x128xf32>
    %62 = arith.addf %59, %61 : vector<32x128xf32>
    %63 = arith.truncf %47 : vector<16x128xf32> to vector<16x128xbf16>
    %c0_47 = arith.constant 0 : index
    %c0_48 = arith.constant 0 : index
    %c0_49 = arith.constant 0 : index
    %64 = vector.load %arg16[%c0_47, %c0_48, %c0_49] : memref<1x48x128xbf16, #tpu.memory_space<vmem>>, vector<1x16x128xbf16>
    %65 = vector.shape_cast %64 : vector<1x16x128xbf16> to vector<16x128xbf16>
    %66 = vector.shape_cast %63 : vector<16x128xbf16> to vector<1x16x128xbf16>
    tpu.vector_store %arg16[%c0_47, %c0_48, %c0_49], %66 {strides = array<i32>} : memref<1x48x128xbf16, #tpu.memory_space<vmem>>, vector<1x16x128xbf16>,
    %67 = arith.truncf %62 : vector<32x128xf32> to vector<32x128xbf16>
    %c0_50 = arith.constant 0 : index
    %c16 = arith.constant 16 : index
    %c0_51 = arith.constant 0 : index
    %68 = vector.load %arg16[%c0_50, %c16, %c0_51] : memref<1x48x128xbf16, #tpu.memory_space<vmem>>, vector<1x32x128xbf16>
    %69 = vector.shape_cast %68 : vector<1x32x128xbf16> to vector<32x128xbf16>
    %70 = vector.shape_cast %67 : vector<32x128xbf16> to vector<1x32x128xbf16>
    tpu.vector_store %arg16[%c0_50, %c16, %c0_51], %70 {strides = array<i32>} : memref<1x48x128xbf16, #tpu.memory_space<vmem>>, vector<1x32x128xbf16>,
    return
  }
  func.func @transform_0(%arg0: i32) -> (i32, i32, i32) {
    %c0_i32 = arith.constant 0 : i32
    %c0_i32_0 = arith.constant 0 : i32
    %c0_i32_1 = arith.constant 0 : i32
    return %arg0, %c0_i32, %c0_i32_0 : i32, i32, i32
  }
  func.func @transform_1(%arg0: i32) -> (i32, i32, i32) {
    %c0_i32 = arith.constant 0 : i32
    %c0_i32_0 = arith.constant 0 : i32
    %c0_i32_1 = arith.constant 0 : i32
    return %arg0, %c0_i32, %c0_i32_0 : i32, i32, i32
  }
  func.func @transform_2(%arg0: i32) -> (i32, i32) {
    %c0_i32 = arith.constant 0 : i32
    %c0_i32_0 = arith.constant 0 : i32
    %c0_i32_1 = arith.constant 0 : i32
    return %c0_i32, %c0_i32_0 : i32, i32
  }
  func.func @transform_3(%arg0: i32) -> (i32, i32) {
    %c0_i32 = arith.constant 0 : i32
    %c0_i32_0 = arith.constant 0 : i32
    %c0_i32_1 = arith.constant 0 : i32
    return %c0_i32, %c0_i32_0 : i32, i32
  }
  func.func @transform_4(%arg0: i32) -> (i32, i32) {
    %c0_i32 = arith.constant 0 : i32
    %c0_i32_0 = arith.constant 0 : i32
    %c0_i32_1 = arith.constant 0 : i32
    return %c0_i32, %c0_i32_0 : i32, i32
  }
  func.func @transform_5(%arg0: i32) -> (i32, i32) {
    %c0_i32 = arith.constant 0 : i32
    %c0_i32_0 = arith.constant 0 : i32
    %c0_i32_1 = arith.constant 0 : i32
    return %c0_i32, %c0_i32_0 : i32, i32
  }
  func.func @transform_6(%arg0: i32) -> (i32, i32) {
    %c0_i32 = arith.constant 0 : i32
    %c0_i32_0 = arith.constant 0 : i32
    %c0_i32_1 = arith.constant 0 : i32
    return %c0_i32, %c0_i32_0 : i32, i32
  }
  func.func @transform_7(%arg0: i32) -> (i32, i32) {
    %c0_i32 = arith.constant 0 : i32
    %c0_i32_0 = arith.constant 0 : i32
    %c0_i32_1 = arith.constant 0 : i32
    return %c0_i32, %c0_i32_0 : i32, i32
  }
  func.func @transform_8(%arg0: i32) -> (i32, i32) {
    %c0_i32 = arith.constant 0 : i32
    %c0_i32_0 = arith.constant 0 : i32
    %c0_i32_1 = arith.constant 0 : i32
    return %c0_i32, %c0_i32_0 : i32, i32
  }
  func.func @transform_9(%arg0: i32) -> (i32, i32) {
    %c0_i32 = arith.constant 0 : i32
    %c0_i32_0 = arith.constant 0 : i32
    %c0_i32_1 = arith.constant 0 : i32
    return %c0_i32, %c0_i32_0 : i32, i32
  }
  func.func @transform_10(%arg0: i32) -> (i32, i32) {
    %c0_i32 = arith.constant 0 : i32
    %c0_i32_0 = arith.constant 0 : i32
    %c0_i32_1 = arith.constant 0 : i32
    return %c0_i32, %c0_i32_0 : i32, i32
  }
  func.func @transform_11(%arg0: i32) -> (i32, i32) {
    %c0_i32 = arith.constant 0 : i32
    %c0_i32_0 = arith.constant 0 : i32
    %c0_i32_1 = arith.constant 0 : i32
    return %c0_i32, %c0_i32_0 : i32, i32
  }
  func.func @transform_12(%arg0: i32) -> (i32, i32) {
    %c0_i32 = arith.constant 0 : i32
    %c0_i32_0 = arith.constant 0 : i32
    %c0_i32_1 = arith.constant 0 : i32
    return %c0_i32, %c0_i32_0 : i32, i32
  }
  func.func @transform_13(%arg0: i32) -> (i32, i32) {
    %c0_i32 = arith.constant 0 : i32
    %c0_i32_0 = arith.constant 0 : i32
    %c0_i32_1 = arith.constant 0 : i32
    return %c0_i32, %c0_i32_0 : i32, i32
  }
  func.func @transform_14(%arg0: i32) -> (i32, i32) {
    %c0_i32 = arith.constant 0 : i32
    %c0_i32_0 = arith.constant 0 : i32
    %c0_i32_1 = arith.constant 0 : i32
    return %c0_i32, %c0_i32_0 : i32, i32
  }
  func.func @transform_15(%arg0: i32) -> (i32, i32, i32) {
    %c0_i32 = arith.constant 0 : i32
    %c0_i32_0 = arith.constant 0 : i32
    %c0_i32_1 = arith.constant 0 : i32
    return %arg0, %c0_i32, %c0_i32_0 : i32, i32, i32
  }
}

</mosaic_0001>

<llo_original>
// kernel: tpu_custom_call.1
$region0: #{tpu_custom_call.1}
  #allocation0 [shape = 'u32[]', space=smem, size = 0x4, offset = 0x4, fixed_abs, tag = 'smem constant byte address 0x4 - core index']
  #allocation1 [shape = 'u32[144,128]{1,0:T(1,128)}', space=vmem, size = 0x12000, scoped, tag = 'internal scratch']
  #allocation2 [shape = 'bf16[16,32]{1,0:T(16,128)(2,1)}', space=vmem, size = 0x1000, scoped, tag = 'scratch operand']
  %s0 = inlined_call_operand.vmem [shape: bf16[2,48,16], index: 0, kind: input, shape index: {}]
  %s1 = inlined_call_operand.vmem [shape: bf16[2,16,16], index: 1, kind: input, shape index: {}]
  %s2 = inlined_call_operand.hbm [shape: bf16[16,32], index: 2, kind: input, shape index: {}]
  %s3 = inlined_call_operand.vmem [shape: f32[1,32], index: 3, kind: input, shape index: {}]
  %s4 = inlined_call_operand.vmem [shape: bf16[64,32], index: 4, kind: input, shape index: {}]
  %s5 = inlined_call_operand.vmem [shape: bf16[32,32], index: 5, kind: input, shape index: {}]
  %s6 = inlined_call_operand.vmem [shape: bf16[32,32], index: 6, kind: input, shape index: {}]
  %s7 = inlined_call_operand.vmem [shape: f32[1,32], index: 7, kind: input, shape index: {}]
  %s8 = inlined_call_operand.vmem [shape: bf16[32,128], index: 8, kind: input, shape index: {}]
  %s9 = inlined_call_operand.vmem [shape: f32[1,128], index: 9, kind: input, shape index: {}]
  %s10 = inlined_call_operand.vmem [shape: bf16[32,64], index: 10, kind: input, shape index: {}]
  %s11 = inlined_call_operand.vmem [shape: f32[1,64], index: 11, kind: input, shape index: {}]
  %s12 = inlined_call_operand.vmem [shape: bf16[64,128], index: 12, kind: input, shape index: {}]
  %s13 = inlined_call_operand.vmem [shape: f32[1,128], index: 13, kind: input, shape index: {}]
  %s14 = inlined_call_operand.hbm [shape: bf16[16,128], index: 14, kind: output, shape index: {0}]
  %s15 = inlined_call_operand.hbm [shape: bf16[2,48,128], index: 15, kind: output, shape index: {1}]
  %16 = xla_tuple %s14, %s15
  %s17 = sld [smem:[#allocation0]]
  $region109: #{tpu_custom_call.1} parent=0
    _
  %s19 = ssub.s32 1, %s17
  %s20 = scalar_select 0, %s19, %s17
  $region1: #{tpu_custom_call.1} parent=0
    #allocation3 [shape = 'u8[4096]{0}', space=vmem, size = 0x1000, scoped, tag = 'input window, operand 2, single buffered']
    #allocation4 [shape = 's32[2]{0}', space=sflag, size = 0x8, scoped, tag = 'scoped memory for tpu_custom_call.1']
    #allocation5 [shape = 's32[2]{0}', space=sflag, size = 0x8, scoped, tag = 'scoped memory for tpu_custom_call.1']
    #allocation6 [shape = 'u8[4096]{0}', space=vmem, size = 0x1000, scoped, tag = 'output window, operand 0, single buffered']
    #allocation7 [shape = 'u8[24576]{0}', space=vmem, size = 0x6000, scoped, tag = 'output window, operand 1']
    #allocation8 [shape = 's32[2]{0}', space=sflag, size = 0x8, scoped, tag = 'scoped memory for tpu_custom_call.1']
    %21 = vsyncpa [#allocation4], 0
    %22 = vsyncpa [#allocation5], 0
    %23 = vsyncpa [#allocation8], 0
    %s24 = scalar_lea.sflag [#allocation8], 1
    %25 = vsyncpa %s24, 0
    loop: start=0, step=1, limit=4
    $region2: #{tpu_custom_call.1} parent=1 // loop_pre_header
      _
    $region3: #{tpu_custom_call.1} parent=1 // loop_header
      %s27 = sphi 0, %s31
      %p28 = scmp.ge.s32.totalorder %s27, 4
      %s37 = sphi 0, %s39
      %s40 = sphi 0, %s37
      %s41 = sphi 0, %s40
      %s57 = sphi 0, %s41
      %s63 = sphi 0, %s65
      %s66 = sphi 0, %s63
      %s67 = sphi 0, %s66
      %s83 = sphi 0, %s67
      %s87 = sphi 0, %s87
      %s89 = sphi 0, %s87
      %s90 = sphi 0, %s89
      %s104 = sphi 0, %s90
      %s108 = sphi 0, %s108
      %s110 = sphi 0, %s108
      %s111 = sphi 0, %s110
      %s125 = sphi 0, %s111
      %s129 = sphi 0, %s129
      %s131 = sphi 0, %s129
      %s132 = sphi 0, %s131
      %s146 = sphi 0, %s132
      %s150 = sphi 0, %s150
      %s152 = sphi 0, %s150
      %s153 = sphi 0, %s152
      %s167 = sphi 0, %s153
      %s171 = sphi 0, %s171
      %s173 = sphi 0, %s171
      %s174 = sphi 0, %s173
      %s188 = sphi 0, %s174
      %s192 = sphi 0, %s192
      %s194 = sphi 0, %s192
      %s195 = sphi 0, %s194
      %s209 = sphi 0, %s195
      %s213 = sphi 0, %s213
      %s215 = sphi 0, %s213
      %s216 = sphi 0, %s215
      %s230 = sphi 0, %s216
      %s234 = sphi 0, %s234
      %s236 = sphi 0, %s234
      %s237 = sphi 0, %s236
      %s251 = sphi 0, %s237
      %s255 = sphi 0, %s255
      %s257 = sphi 0, %s255
      %s258 = sphi 0, %s257
      %s272 = sphi 0, %s258
      %s276 = sphi 0, %s276
      %s278 = sphi 0, %s276
      %s279 = sphi 0, %s278
      %s293 = sphi 0, %s279
      %s297 = sphi 0, %s297
      %s299 = sphi 0, %s297
      %s300 = sphi 0, %s299
      %s314 = sphi 0, %s300
      %s318 = sphi 0, %s318
      %s320 = sphi 0, %s318
      %s321 = sphi 0, %s320
      %s335 = sphi 0, %s321
      %s339 = sphi 0, %s339
      %s341 = sphi 0, %s339
      %s342 = sphi 0, %s341
      %s356 = sphi 0, %s342
      %s362 = sphi 0, %s364
      %s365 = sphi 0, %s362
      %s366 = sphi 0, %s365
      %s382 = sphi 0, %s366
    $region4: #{tpu_custom_call.1} parent=1 // loop_header_branch
      %30 = sbr.rel (%p28) target = $region8
    $region5: #{tpu_custom_call.1} parent=1 // loop_body
      %s32 = ssub.s32 %s27, 1
      %s33 = ssub.s32 %s27, 2
      %s34 = sadd.s32 %s27, 1
      %s35 = ssub.s32 %s27, %s34
      %p36 = scmp.eq.s32.totalorder %s35, 0
      %s38 = sadd.s32 %s37, 1
      %s39 = scalar_select %p36, %s37, %s38
      %p42 = pneg %p36
      %p43 = scmp.eq.s32.totalorder %s27, 1
      %p44 = por %p42, %p43
      %p45 = scmp.ne.s32.totalorder %s37, %s40
      %p46 = scmp.eq.s32.totalorder %s27, 0
      %p47 = por %p45, %p46
      %p48 = scmp.ne.s32.totalorder %s37, %s40
      %p49 = scmp.eq.s32.totalorder %s32, 1
      %p50 = por %p48, %p49
      %p51 = scmp.ne.s32.totalorder %s40, %s41
      %p52 = scmp.eq.s32.totalorder %s32, 0
      %p53 = por %p51, %p52
      %p54 = scmp.ne.s32.totalorder %s40, %s41
      %p55 = scmp.eq.s32.totalorder %s33, 1
      %p56 = por %p54, %p55
      %p58 = scmp.ne.s32.totalorder %s41, %s57
      %p59 = scmp.eq.s32.totalorder %s33, 0
      %p60 = por %p58, %p59
      %s61 = ssub.s32 %s27, %s34
      %p62 = scmp.eq.s32.totalorder %s61, 0
      %s64 = sadd.s32 %s63, 1
      %s65 = scalar_select %p62, %s63, %s64
      %p68 = pneg %p62
      %p69 = scmp.eq.s32.totalorder %s27, 1
      %p70 = por %p68, %p69
      %p71 = scmp.ne.s32.totalorder %s63, %s66
      %p72 = scmp.eq.s32.totalorder %s27, 0
      %p73 = por %p71, %p72
      %p74 = scmp.ne.s32.totalorder %s63, %s66
      %p75 = scmp.eq.s32.totalorder %s32, 1
      %p76 = por %p74, %p75
      %p77 = scmp.ne.s32.totalorder %s66, %s67
      %p78 = scmp.eq.s32.totalorder %s32, 0
      %p79 = por %p77, %p78
      %p80 = scmp.ne.s32.totalorder %s66, %s67
      %p81 = scmp.eq.s32.totalorder %s33, 1
      %p82 = por %p80, %p81
      %p84 = scmp.ne.s32.totalorder %s67, %s83
      %p85 = scmp.eq.s32.totalorder %s33, 0
      %p86 = por %p84, %p85
      %s88 = sadd.s32 %s87, 1
      %p91 = scmp.eq.s32.totalorder %s27, 1
      %p92 = scmp.ne.s32.totalorder %s87, %s89
      %p93 = scmp.eq.s32.totalorder %s27, 0
      %p94 = por %p92, %p93
      %p95 = scmp.ne.s32.totalorder %s87, %s89
      %p96 = scmp.eq.s32.totalorder %s32, 1
      %p97 = por %p95, %p96
      %p98 = scmp.ne.s32.totalorder %s89, %s90
      %p99 = scmp.eq.s32.totalorder %s32, 0
      %p100 = por %p98, %p99
      %p101 = scmp.ne.s32.totalorder %s89, %s90
      %p102 = scmp.eq.s32.totalorder %s33, 1
      %p103 = por %p101, %p102
      %p105 = scmp.ne.s32.totalorder %s90, %s104
      %p106 = scmp.eq.s32.totalorder %s33, 0
      %p107 = por %p105, %p106
      %s109 = sadd.s32 %s108, 1
      %p112 = scmp.eq.s32.totalorder %s27, 1
      %p113 = scmp.ne.s32.totalorder %s108, %s110
      %p114 = scmp.eq.s32.totalorder %s27, 0
      %p115 = por %p113, %p114
      %p116 = scmp.ne.s32.totalorder %s108, %s110
      %p117 = scmp.eq.s32.totalorder %s32, 1
      %p118 = por %p116, %p117
      %p119 = scmp.ne.s32.totalorder %s110, %s111
      %p120 = scmp.eq.s32.totalorder %s32, 0
      %p121 = por %p119, %p120
      %p122 = scmp.ne.s32.totalorder %s110, %s111
      %p123 = scmp.eq.s32.totalorder %s33, 1
      %p124 = por %p122, %p123
      %p126 = scmp.ne.s32.totalorder %s111, %s125
      %p127 = scmp.eq.s32.totalorder %s33, 0
      %p128 = por %p126, %p127
      %s130 = sadd.s32 %s129, 1
      %p133 = scmp.eq.s32.totalorder %s27, 1
      %p134 = scmp.ne.s32.totalorder %s129, %s131
      %p135 = scmp.eq.s32.totalorder %s27, 0
      %p136 = por %p134, %p135
      %p137 = scmp.ne.s32.totalorder %s129, %s131
      %p138 = scmp.eq.s32.totalorder %s32, 1
      %p139 = por %p137, %p138
      %p140 = scmp.ne.s32.totalorder %s131, %s132
      %p141 = scmp.eq.s32.totalorder %s32, 0
      %p142 = por %p140, %p141
      %p143 = scmp.ne.s32.totalorder %s131, %s132
      %p144 = scmp.eq.s32.totalorder %s33, 1
      %p145 = por %p143, %p144
      %p147 = scmp.ne.s32.totalorder %s132, %s146
      %p148 = scmp.eq.s32.totalorder %s33, 0
      %p149 = por %p147, %p148
      %s151 = sadd.s32 %s150, 1
      %p154 = scmp.eq.s32.totalorder %s27, 1
      %p155 = scmp.ne.s32.totalorder %s150, %s152
      %p156 = scmp.eq.s32.totalorder %s27, 0
      %p157 = por %p155, %p156
      %p158 = scmp.ne.s32.totalorder %s150, %s152
      %p159 = scmp.eq.s32.totalorder %s32, 1
      %p160 = por %p158, %p159
      %p161 = scmp.ne.s32.totalorder %s152, %s153
      %p162 = scmp.eq.s32.totalorder %s32, 0
      %p163 = por %p161, %p162
      %p164 = scmp.ne.s32.totalorder %s152, %s153
      %p165 = scmp.eq.s32.totalorder %s33, 1
      %p166 = por %p164, %p165
      %p168 = scmp.ne.s32.totalorder %s153, %s167
      %p169 = scmp.eq.s32.totalorder %s33, 0
      %p170 = por %p168, %p169
      %s172 = sadd.s32 %s171, 1
      %p175 = scmp.eq.s32.totalorder %s27, 1
      %p176 = scmp.ne.s32.totalorder %s171, %s173
      %p177 = scmp.eq.s32.totalorder %s27, 0
      %p178 = por %p176, %p177
      %p179 = scmp.ne.s32.totalorder %s171, %s173
      %p180 = scmp.eq.s32.totalorder %s32, 1
      %p181 = por %p179, %p180
      %p182 = scmp.ne.s32.totalorder %s173, %s174
      %p183 = scmp.eq.s32.totalorder %s32, 0
      %p184 = por %p182, %p183
      %p185 = scmp.ne.s32.totalorder %s173, %s174
      %p186 = scmp.eq.s32.totalorder %s33, 1
      %p187 = por %p185, %p186
      %p189 = scmp.ne.s32.totalorder %s174, %s188
      %p190 = scmp.eq.s32.totalorder %s33, 0
      %p191 = por %p189, %p190
      %s193 = sadd.s32 %s192, 1
      %p196 = scmp.eq.s32.totalorder %s27, 1
      %p197 = scmp.ne.s32.totalorder %s192, %s194
      %p198 = scmp.eq.s32.totalorder %s27, 0
      %p199 = por %p197, %p198
      %p200 = scmp.ne.s32.totalorder %s192, %s194
      %p201 = scmp.eq.s32.totalorder %s32, 1
      %p202 = por %p200, %p201
      %p203 = scmp.ne.s32.totalorder %s194, %s195
      %p204 = scmp.eq.s32.totalorder %s32, 0
      %p205 = por %p203, %p204
      %p206 = scmp.ne.s32.totalorder %s194, %s195
      %p207 = scmp.eq.s32.totalorder %s33, 1
      %p208 = por %p206, %p207
      %p210 = scmp.ne.s32.totalorder %s195, %s209
      %p211 = scmp.eq.s32.totalorder %s33, 0
      %p212 = por %p210, %p211
      %s214 = sadd.s32 %s213, 1
      %p217 = scmp.eq.s32.totalorder %s27, 1
      %p218 = scmp.ne.s32.totalorder %s213, %s215
      %p219 = scmp.eq.s32.totalorder %s27, 0
      %p220 = por %p218, %p219
      %p221 = scmp.ne.s32.totalorder %s213, %s215
      %p222 = scmp.eq.s32.totalorder %s32, 1
      %p223 = por %p221, %p222
      %p224 = scmp.ne.s32.totalorder %s215, %s216
      %p225 = scmp.eq.s32.totalorder %s32, 0
      %p226 = por %p224, %p225
      %p227 = scmp.ne.s32.totalorder %s215, %s216
      %p228 = scmp.eq.s32.totalorder %s33, 1
      %p229 = por %p227, %p228
      %p231 = scmp.ne.s32.totalorder %s216, %s230
      %p232 = scmp.eq.s32.totalorder %s33, 0
      %p233 = por %p231, %p232
      %s235 = sadd.s32 %s234, 1
      %p238 = scmp.eq.s32.totalorder %s27, 1
      %p239 = scmp.ne.s32.totalorder %s234, %s236
      %p240 = scmp.eq.s32.totalorder %s27, 0
      %p241 = por %p239, %p240
      %p242 = scmp.ne.s32.totalorder %s234, %s236
      %p243 = scmp.eq.s32.totalorder %s32, 1
      %p244 = por %p242, %p243
      %p245 = scmp.ne.s32.totalorder %s236, %s237
      %p246 = scmp.eq.s32.totalorder %s32, 0
      %p247 = por %p245, %p246
      %p248 = scmp.ne.s32.totalorder %s236, %s237
      %p249 = scmp.eq.s32.totalorder %s33, 1
      %p250 = por %p248, %p249
      %p252 = scmp.ne.s32.totalorder %s237, %s251
      %p253 = scmp.eq.s32.totalorder %s33, 0
      %p254 = por %p252, %p253
      %s256 = sadd.s32 %s255, 1
      %p259 = scmp.eq.s32.totalorder %s27, 1
      %p260 = scmp.ne.s32.totalorder %s255, %s257
      %p261 = scmp.eq.s32.totalorder %s27, 0
      %p262 = por %p260, %p261
      %p263 = scmp.ne.s32.totalorder %s255, %s257
      %p264 = scmp.eq.s32.totalorder %s32, 1
      %p265 = por %p263, %p264
      %p266 = scmp.ne.s32.totalorder %s257, %s258
      %p267 = scmp.eq.s32.totalorder %s32, 0
      %p268 = por %p266, %p267
      %p269 = scmp.ne.s32.totalorder %s257, %s258
      %p270 = scmp.eq.s32.totalorder %s33, 1
      %p271 = por %p269, %p270
      %p273 = scmp.ne.s32.totalorder %s258, %s272
      %p274 = scmp.eq.s32.totalorder %s33, 0
      %p275 = por %p273, %p274
      %s277 = sadd.s32 %s276, 1
      %p280 = scmp.eq.s32.totalorder %s27, 1
      %p281 = scmp.ne.s32.totalorder %s276, %s278
      %p282 = scmp.eq.s32.totalorder %s27, 0
      %p283 = por %p281, %p282
      %p284 = scmp.ne.s32.totalorder %s276, %s278
      %p285 = scmp.eq.s32.totalorder %s32, 1
      %p286 = por %p284, %p285
      %p287 = scmp.ne.s32.totalorder %s278, %s279
      %p288 = scmp.eq.s32.totalorder %s32, 0
      %p289 = por %p287, %p288
      %p290 = scmp.ne.s32.totalorder %s278, %s279
      %p291 = scmp.eq.s32.totalorder %s33, 1
      %p292 = por %p290, %p291
      %p294 = scmp.ne.s32.totalorder %s279, %s293
      %p295 = scmp.eq.s32.totalorder %s33, 0
      %p296 = por %p294, %p295
      %s298 = sadd.s32 %s297, 1
      %p301 = scmp.eq.s32.totalorder %s27, 1
      %p302 = scmp.ne.s32.totalorder %s297, %s299
      %p303 = scmp.eq.s32.totalorder %s27, 0
      %p304 = por %p302, %p303
      %p305 = scmp.ne.s32.totalorder %s297, %s299
      %p306 = scmp.eq.s32.totalorder %s32, 1
      %p307 = por %p305, %p306
      %p308 = scmp.ne.s32.totalorder %s299, %s300
      %p309 = scmp.eq.s32.totalorder %s32, 0
      %p310 = por %p308, %p309
      %p311 = scmp.ne.s32.totalorder %s299, %s300
      %p312 = scmp.eq.s32.totalorder %s33, 1
      %p313 = por %p311, %p312
      %p315 = scmp.ne.s32.totalorder %s300, %s314
      %p316 = scmp.eq.s32.totalorder %s33, 0
      %p317 = por %p315, %p316
      %s319 = sadd.s32 %s318, 1
      %p322 = scmp.eq.s32.totalorder %s27, 1
      %p323 = scmp.ne.s32.totalorder %s318, %s320
      %p324 = scmp.eq.s32.totalorder %s27, 0
      %p325 = por %p323, %p324
      %p326 = scmp.ne.s32.totalorder %s318, %s320
      %p327 = scmp.eq.s32.totalorder %s32, 1
      %p328 = por %p326, %p327
      %p329 = scmp.ne.s32.totalorder %s320, %s321
      %p330 = scmp.eq.s32.totalorder %s32, 0
      %p331 = por %p329, %p330
      %p332 = scmp.ne.s32.totalorder %s320, %s321
      %p333 = scmp.eq.s32.totalorder %s33, 1
      %p334 = por %p332, %p333
      %p336 = scmp.ne.s32.totalorder %s321, %s335
      %p337 = scmp.eq.s32.totalorder %s33, 0
      %p338 = por %p336, %p337
      %s340 = sadd.s32 %s339, 1
      %p343 = scmp.eq.s32.totalorder %s27, 1
      %p344 = scmp.ne.s32.totalorder %s339, %s341
      %p345 = scmp.eq.s32.totalorder %s27, 0
      %p346 = por %p344, %p345
      %p347 = scmp.ne.s32.totalorder %s339, %s341
      %p348 = scmp.eq.s32.totalorder %s32, 1
      %p349 = por %p347, %p348
      %p350 = scmp.ne.s32.totalorder %s341, %s342
      %p351 = scmp.eq.s32.totalorder %s32, 0
      %p352 = por %p350, %p351
      %p353 = scmp.ne.s32.totalorder %s341, %s342
      %p354 = scmp.eq.s32.totalorder %s33, 1
      %p355 = por %p353, %p354
      %p357 = scmp.ne.s32.totalorder %s342, %s356
      %p358 = scmp.eq.s32.totalorder %s33, 0
      %p359 = por %p357, %p358
      %s360 = ssub.s32 %s27, %s34
      %p361 = scmp.eq.s32.totalorder %s360, 0
      %s363 = sadd.s32 %s362, 1
      %s364 = scalar_select %p361, %s362, %s363
      %p367 = pneg %p361
      %p368 = scmp.eq.s32.totalorder %s27, 1
      %p369 = por %p367, %p368
      %p370 = scmp.ne.s32.totalorder %s362, %s365
      %p371 = scmp.eq.s32.totalorder %s27, 0
      %p372 = por %p370, %p371
      %p373 = scmp.ne.s32.totalorder %s362, %s365
      %p374 = scmp.eq.s32.totalorder %s32, 1
      %p375 = por %p373, %p374
      %p376 = scmp.ne.s32.totalorder %s365, %s366
      %p377 = scmp.eq.s32.totalorder %s32, 0
      %p378 = por %p376, %p377
      %p379 = scmp.ne.s32.totalorder %s365, %s366
      %p380 = scmp.eq.s32.totalorder %s33, 1
      %p381 = por %p379, %p380
      %p383 = scmp.ne.s32.totalorder %s366, %s382
      %p384 = scmp.eq.s32.totalorder %s33, 0
      %p385 = por %p383, %p384
      %p386 = scmp.le.s32.totalorder 1, %s27
      %p387 = scmp.lt.s32.totalorder %s27, 3
      %p388 = pnand %p386, %p387
      %p389 = pneg %p388
      // Predicated region
      $region9: #{tpu_custom_call.1} parent=5 // pred_check
        _
      $region10: #{tpu_custom_call.1} parent=5 // pred_check_branch
        %391 = sbr.rel (%p388) target = $region12
      $region11: #{tpu_custom_call.1} parent=5 // pred_region
        %s392 = ssub.s32 %s27, 1
        // Predicated region
        $region13: #{tpu_custom_call.1} parent=11 // pred_check
          %p393 = pneg %p100
        $region14: #{tpu_custom_call.1} parent=11 // pred_check_branch
          %395 = sbr.rel (%p393) target = $region16
        $region15: #{tpu_custom_call.1} parent=11 // pred_region
          %s397 = ssub.s32 128, 128
          %398 = vsyncadd [#allocation4], %s397
          %s399 = sshll.u32 [#allocation3], 4
          %s400 = int_to_ptr.vmem [resolvable:$true] %s399
          %405 = dma.hbm_to_vmem [thread:$0]  %s2, 128, %s400, [#allocation4], 64, 64, 4
        $region16: #{tpu_custom_call.1} parent=11 // pred_fallthru
          _
        // Predicated region
        $region17: #{tpu_custom_call.1} parent=11 // pred_check
          %p406 = pneg %p121
        $region18: #{tpu_custom_call.1} parent=11 // pred_check_branch
          %408 = sbr.rel (%p406) target = $region20
        $region19: #{tpu_custom_call.1} parent=11 // pred_region
          _
        $region20: #{tpu_custom_call.1} parent=11 // pred_fallthru
          _
        // Predicated region
        $region21: #{tpu_custom_call.1} parent=11 // pred_check
          %p409 = pneg %p142
        $region22: #{tpu_custom_call.1} parent=11 // pred_check_branch
          %411 = sbr.rel (%p409) target = $region24
        $region23: #{tpu_custom_call.1} parent=11 // pred_region
          _
        $region24: #{tpu_custom_call.1} parent=11 // pred_fallthru
          _
        // Predicated region
        $region25: #{tpu_custom_call.1} parent=11 // pred_check
          %p412 = pneg %p163
        $region26: #{tpu_custom_call.1} parent=11 // pred_check_branch
          %414 = sbr.rel (%p412) target = $region28
        $region27: #{tpu_custom_call.1} parent=11 // pred_region
          _
        $region28: #{tpu_custom_call.1} parent=11 // pred_fallthru
          _
        // Predicated region
        $region29: #{tpu_custom_call.1} parent=11 // pred_check
          %p415 = pneg %p184
        $region30: #{tpu_custom_call.1} parent=11 // pred_check_branch
          %417 = sbr.rel (%p415) target = $region32
        $region31: #{tpu_custom_call.1} parent=11 // pred_region
          _
        $region32: #{tpu_custom_call.1} parent=11 // pred_fallthru
          _
        // Predicated region
        $region33: #{tpu_custom_call.1} parent=11 // pred_check
          %p418 = pneg %p205
        $region34: #{tpu_custom_call.1} parent=11 // pred_check_branch
          %420 = sbr.rel (%p418) target = $region36
        $region35: #{tpu_custom_call.1} parent=11 // pred_region
          _
        $region36: #{tpu_custom_call.1} parent=11 // pred_fallthru
          _
        // Predicated region
        $region37: #{tpu_custom_call.1} parent=11 // pred_check
          %p421 = pneg %p226
        $region38: #{tpu_custom_call.1} parent=11 // pred_check_branch
          %423 = sbr.rel (%p421) target = $region40
        $region39: #{tpu_custom_call.1} parent=11 // pred_region
          _
        $region40: #{tpu_custom_call.1} parent=11 // pred_fallthru
          _
        // Predicated region
        $region41: #{tpu_custom_call.1} parent=11 // pred_check
          %p424 = pneg %p247
        $region42: #{tpu_custom_call.1} parent=11 // pred_check_branch
          %426 = sbr.rel (%p424) target = $region44
        $region43: #{tpu_custom_call.1} parent=11 // pred_region
          _
        $region44: #{tpu_custom_call.1} parent=11 // pred_fallthru
          _
        // Predicated region
        $region45: #{tpu_custom_call.1} parent=11 // pred_check
          %p427 = pneg %p268
        $region46: #{tpu_custom_call.1} parent=11 // pred_check_branch
          %429 = sbr.rel (%p427) target = $region48
        $region47: #{tpu_custom_call.1} parent=11 // pred_region
          _
        $region48: #{tpu_custom_call.1} parent=11 // pred_fallthru
          _
        // Predicated region
        $region49: #{tpu_custom_call.1} parent=11 // pred_check
          %p430 = pneg %p289
        $region50: #{tpu_custom_call.1} parent=11 // pred_check_branch
          %432 = sbr.rel (%p430) target = $region52
        $region51: #{tpu_custom_call.1} parent=11 // pred_region
          _
        $region52: #{tpu_custom_call.1} parent=11 // pred_fallthru
          _
        // Predicated region
        $region53: #{tpu_custom_call.1} parent=11 // pred_check
          %p433 = pneg %p310
        $region54: #{tpu_custom_call.1} parent=11 // pred_check_branch
          %435 = sbr.rel (%p433) target = $region56
        $region55: #{tpu_custom_call.1} parent=11 // pred_region
          _
        $region56: #{tpu_custom_call.1} parent=11 // pred_fallthru
          _
        // Predicated region
        $region57: #{tpu_custom_call.1} parent=11 // pred_check
          %p436 = pneg %p331
        $region58: #{tpu_custom_call.1} parent=11 // pred_check_branch
          %438 = sbr.rel (%p436) target = $region60
        $region59: #{tpu_custom_call.1} parent=11 // pred_region
          _
        $region60: #{tpu_custom_call.1} parent=11 // pred_fallthru
          _
      $region12: #{tpu_custom_call.1} parent=5 // pred_fallthru
        _
      %p439 = scmp.lt.s32.totalorder %s27, 2
      // Predicated region
      $region61: #{tpu_custom_call.1} parent=5 // pred_check
        %p440 = pneg %p439
      $region62: #{tpu_custom_call.1} parent=5 // pred_check_branch
        %442 = sbr.rel (%p440) target = $region64
      $region63: #{tpu_custom_call.1} parent=5 // pred_region
        // Predicated region
        $region65: #{tpu_custom_call.1} parent=63 // pred_check
          %p443 = pneg %p47
        $region66: #{tpu_custom_call.1} parent=63 // pred_check_branch
          %445 = sbr.rel (%p443) target = $region68
        $region67: #{tpu_custom_call.1} parent=63 // pred_region
          %p446 = scmp.lt.s32.totalorder %s27, 1
          %s447 = scalar_select %p446, %s27, 1
          %s448 = smul.addr %s447, 6
          %s449 = smul.addr %s448, 4
          %s450 = scalar_lea.vmem %s0, %s449
        $region68: #{tpu_custom_call.1} parent=63 // pred_fallthru
          _
        // Predicated region
        $region69: #{tpu_custom_call.1} parent=63 // pred_check
          %p451 = pneg %p73
        $region70: #{tpu_custom_call.1} parent=63 // pred_check_branch
          %453 = sbr.rel (%p451) target = $region72
        $region71: #{tpu_custom_call.1} parent=63 // pred_region
          %p454 = scmp.lt.s32.totalorder %s27, 1
          %s455 = scalar_select %p454, %s27, 1
          %s456 = smul.addr %s455, 2
          %s457 = smul.addr %s456, 4
          %s458 = scalar_lea.vmem %s1, %s457
        $region72: #{tpu_custom_call.1} parent=63 // pred_fallthru
          _
      $region64: #{tpu_custom_call.1} parent=5 // pred_fallthru
        _
      %p459 = scmp.le.s32.totalorder 1, %s27
      %p460 = scmp.lt.s32.totalorder %s27, 3
      %p461 = pnand %p459, %p460
      %p462 = pneg %p461
      // Predicated region
      $region73: #{tpu_custom_call.1} parent=5 // pred_check
        _
      $region74: #{tpu_custom_call.1} parent=5 // pred_check_branch
        %464 = sbr.rel (%p461) target = $region76
      $region75: #{tpu_custom_call.1} parent=5 // pred_region
        %s465 = ssub.s32 %s27, 1
        // Predicated region
        $region77: #{tpu_custom_call.1} parent=75 // pred_check
          %p466 = pneg %p100
        $region78: #{tpu_custom_call.1} parent=75 // pred_check_branch
          %468 = sbr.rel (%p466) target = $region80
        $region79: #{tpu_custom_call.1} parent=75 // pred_region
          %469 = dma.done [#allocation4], 128
        $region80: #{tpu_custom_call.1} parent=75 // pred_fallthru
          _
        %p470 = scmp.lt.s32.totalorder %s32, 1
        %s471 = scalar_select %p470, %s32, 1
        %s472 = smul.addr %s471, 6
        %s473 = smul.addr %s472, 4
        %s474 = scalar_lea.vmem %s0, %s473
        %p475 = pneg %p53
        %p476 = pneg %p50
        %p477 = scmp.lt.s32.totalorder %s32, 1
        %s478 = scalar_select %p477, %s32, 1
        %s479 = smul.addr %s478, 2
        %s480 = smul.addr %s479, 4
        %s481 = scalar_lea.vmem %s1, %s480
        %p482 = pneg %p79
        %p483 = pneg %p76
        %p484 = pneg %p100
        %p485 = pneg %p97
        %p486 = pneg %p121
        %p487 = pneg %p118
        %p488 = pneg %p142
        %p489 = pneg %p139
        %p490 = pneg %p163
        %p491 = pneg %p160
        %p492 = pneg %p184
        %p493 = pneg %p181
        %p494 = pneg %p205
        %p495 = pneg %p202
        %p496 = pneg %p226
        %p497 = pneg %p223
        %p498 = pneg %p247
        %p499 = pneg %p244
        %p500 = pneg %p268
        %p501 = pneg %p265
        %p502 = pneg %p289
        %p503 = pneg %p286
        %p504 = pneg %p310
        %p505 = pneg %p307
        %p506 = pneg %p331
        %p507 = pneg %p328
        %p508 = pneg %p352
        %p509 = pneg %p349
        %p510 = pneg %p378
        %p511 = pneg %p375
        %s512 = sand.u32 %s365, 1
        %s513 = scalar_lea.sflag [#allocation8], %s512
        %s514 = sand.u32 %s365, 1
        %s515 = smul.addr %s514, 24
        %s516 = scalar_lea.vmem [#allocation7], %s515
        %p517 = scmp.lt.s32.totalorder %s32, 1
        %s518 = scalar_select %p517, %s32, 1
        %s519 = smul.addr %s518, 6
        %s520 = smul.addr %s519, 4
        %s521 = scalar_lea.vmem %s0, %s520
        %p522 = scmp.lt.s32.totalorder %s32, 1
        %s523 = scalar_select %p522, %s32, 1
        %s524 = smul.addr %s523, 2
        %s525 = smul.addr %s524, 4
        %s526 = scalar_lea.vmem %s1, %s525
        %p528 = scmp.eq.s32.totalorder %s32, 0
        // Predicated region
        $region81: #{tpu_custom_call.1} parent=75 // pred_check
          %p529 = pneg %p528
        $region82: #{tpu_custom_call.1} parent=75 // pred_check_branch
          %531 = sbr.rel (%p529) target = $region84
        $region83: #{tpu_custom_call.1} parent=75 // pred_region
          %vm532 = vcmask 261120
          %533 = vst.msk [vmem:[#allocation2] sm:$0xff] %vm532, 0
        $region84: #{tpu_custom_call.1} parent=75 // pred_fallthru
          _
        %v534 = vld [vmem:[%s526] sm:$0xf]
        %v535 = vld [vmem:[%s526 + $0x4] sm:$0xf]
        %v536 = vld [vmem:[#allocation3] sm:$0xf]
        %v537 = vld [vmem:[#allocation3 + $0x4] sm:$0xf]
        %v538 = vld [vmem:[%s3] sm:$0x1]
        %v540 = vlaneseq
        %v541 = vshrl.u32 %v540, 7
        %v542 = vsub.s32 0, %v541
        %v543 = vrot.slane %v538, %v542
        %v547 = vunpack.c.l.b16 %v534
        %v548 = vunpack.c.l.b16 %v535
        %v549 = vpack.c.b16 %v548, %v547
        %v552 = vunpack.c.l.b16 %v536
        %v553 = vunpack.c.l.b16 %v537
        %v554 = vpack.c.b16 %v553, %v552
        %vm556 = vcmask 130048
        %v558 = vsel %vm556, %v549, 0
        %560 = vmatprep.subr.bf16.mxu0 0
        %561 = vmatpush1.bf16.msra.mxu0 %v554
        %562 = vmatprep.subr.bf16.mxu0 0
        %563 = vmatpush1.bf16.msra.mxu0 0
        %564 = vmatprep.subr.bf16.mxu0 0
        %565 = vmatpush1.bf16.msra.mxu0 0
        %566 = vmatprep.subr.bf16.mxu0 0
        %567 = vmatpush1.bf16.msra.mxu0 0
        %568 = vmatprep.subr.bf16.mxu0 0
        %569 = vmatpush1.bf16.msra.mxu0 0
        %570 = vmatprep.subr.bf16.mxu0 0
        %571 = vmatpush1.bf16.msra.mxu0 0
        %572 = vmatprep.subr.bf16.mxu0 0
        %573 = vmatpush1.bf16.msra.mxu0 0
        %574 = vmatprep.subr.bf16.mxu0 0
        %575 = vmatpush1.bf16.msra.mxu0 0
        %576 = vmatprep.subr.bf16.mxu0 0
        %577 = vmatpush1.bf16.msra.mxu0 0
        %578 = vmatprep.subr.bf16.mxu0 0
        %579 = vmatpush1.bf16.msra.mxu0 0
        %580 = vmatprep.subr.bf16.mxu0 0
        %581 = vmatpush1.bf16.msra.mxu0 0
        %582 = vmatprep.subr.bf16.mxu0 0
        %583 = vmatpush1.bf16.msra.mxu0 0
        %584 = vmatprep.subr.bf16.mxu0 0
        %585 = vmatpush1.bf16.msra.mxu0 0
        %586 = vmatprep.subr.bf16.mxu0 0
        %587 = vmatpush1.bf16.msra.mxu0 0
        %588 = vmatprep.subr.bf16.mxu0 0
        %589 = vmatpush1.bf16.msra.mxu0 0
        %590 = vmatprep.subr.bf16.mxu0 0
        %591 = vmatpush1.bf16.msra.mxu0 0
        %592 = vmatprep.mubr.bf16.mxu0 0
        %593 = vmatmul.mubr.bf16.gmra.mrb[0].mxu0 %v558
        %v594 = vpop.f32.mrb[0].mxu0
        %v595 = vadd.f32 %v543, %v594
        %v596 = vpop.f32.mrb[0].mxu0
        %v597 = vpop.f32.mrb[0].mxu0
        %v598 = vadd.f32 %v543, %v597
        %v599 = vpop.f32.mrb[0].mxu0
        %600 = vdwg.mxu0
        %v601 = vmax.f32 %v595, 0.0
        %v602 = vmax.f32 %v598, 0.0
        %v603 = vpack.c.bf16 %v602, %v601
        %v604 = vld [vmem:[#allocation2] sm:$0xff]
        %606 = vrot.lane.b32.xlu0 %v603, 32
        %v607 = vpop.permute.xlu0 %606
        %vm608 = vcmask 261120
        %v611 = vsel %vm608, %v604, %v607
        %v612 = vld [vmem:[%s4] sm:$0xf]
        %v613 = vld [vmem:[%s4 + $0x4] sm:$0xf]
        %v614 = vld [vmem:[%s4 + $0x8] sm:$0xf]
        %v615 = vld [vmem:[%s4 + $0xc] sm:$0xf]
        %v616 = vld [vmem:[%s4 + $0x10] sm:$0xf]
        %v617 = vld [vmem:[%s4 + $0x14] sm:$0xf]
        %v618 = vld [vmem:[%s4 + $0x18] sm:$0xf]
        %v619 = vld [vmem:[%s4 + $0x1c] sm:$0xf]
        %v628 = vunpack.c.l.b16 %v612
        %v629 = vunpack.c.l.b16 %v613
        %v630 = vunpack.c.l.b16 %v614
        %v631 = vunpack.c.l.b16 %v615
        %v632 = vunpack.c.l.b16 %v616
        %v633 = vunpack.c.l.b16 %v617
        %v634 = vunpack.c.l.b16 %v618
        %v635 = vunpack.c.l.b16 %v619
        %v636 = vpack.c.b16 %v629, %v628
        %v637 = vpack.c.b16 %v631, %v630
        %v638 = vpack.c.b16 %v633, %v632
        %v639 = vpack.c.b16 %v635, %v634
        %vm644 = vcmask 523264
        %v645 = vsel %vm644, %v611, 0
        %647 = vmatprep.subr.bf16.mxu0 0
        %648 = vmatpush1.bf16.msra.mxu0 %v636
        %649 = vmatprep.subr.bf16.mxu0 0
        %650 = vmatpush1.bf16.msra.mxu0 %v637
        %651 = vmatprep.subr.bf16.mxu0 0
        %652 = vmatpush1.bf16.msra.mxu0 %v638
        %653 = vmatprep.subr.bf16.mxu0 0
        %654 = vmatpush1.bf16.msra.mxu0 %v639
        %655 = vmatprep.subr.bf16.mxu0 0
        %656 = vmatpush1.bf16.msra.mxu0 0
        %657 = vmatprep.subr.bf16.mxu0 0
        %658 = vmatpush1.bf16.msra.mxu0 0
        %659 = vmatprep.subr.bf16.mxu0 0
        %660 = vmatpush1.bf16.msra.mxu0 0
        %661 = vmatprep.subr.bf16.mxu0 0
        %662 = vmatpush1.bf16.msra.mxu0 0
        %663 = vmatprep.subr.bf16.mxu0 0
        %664 = vmatpush1.bf16.msra.mxu0 0
        %665 = vmatprep.subr.bf16.mxu0 0
        %666 = vmatpush1.bf16.msra.mxu0 0
        %667 = vmatprep.subr.bf16.mxu0 0
        %668 = vmatpush1.bf16.msra.mxu0 0
        %669 = vmatprep.subr.bf16.mxu0 0
        %670 = vmatpush1.bf16.msra.mxu0 0
        %671 = vmatprep.subr.bf16.mxu0 0
        %672 = vmatpush1.bf16.msra.mxu0 0
        %673 = vmatprep.subr.bf16.mxu0 0
        %674 = vmatpush1.bf16.msra.mxu0 0
        %675 = vmatprep.subr.bf16.mxu0 0
        %676 = vmatpush1.bf16.msra.mxu0 0
        %677 = vmatprep.subr.bf16.mxu0 0
        %678 = vmatpush1.bf16.msra.mxu0 0
        %679 = vmatprep.mubr.bf16.mxu0 0
        %680 = vmatmul.mubr.bf16.gmra.mrb[0].mxu0 %v645
        %v681 = vpop.f32.mrb[0].mxu0
        %v682 = vadd.f32 0.0, %v681
        %v683 = vpop.f32.mrb[0].mxu0
        %v684 = vpop.f32.mrb[0].mxu0
        %v685 = vadd.f32 0.0, %v684
        %v686 = vpop.f32.mrb[0].mxu0
        %687 = vdwg.mxu0
        %v688 = vmax.f32 %v682, 0.0
        %v689 = vmax.f32 %v685, 0.0
        %v690 = vpack.c.bf16 %v689, %v688
        %691 = vst.msk [vmem:[#allocation2] sm:$0xff] %vm608, %v690
        %v692 = vld [vmem:[%s521] sm:$0xf]
        %v693 = vld [vmem:[%s521 + $0x4] sm:$0xf]
        %v694 = vld [vmem:[%s521 + $0x8] sm:$0xf]
        %v695 = vld [vmem:[%s521 + $0xc] sm:$0xf]
        %v696 = vld [vmem:[%s521 + $0x10] sm:$0xf]
        %v697 = vld [vmem:[%s521 + $0x14] sm:$0xf]
        %v704 = vunpack.c.l.b16 %v692
        %v705 = vunpack.c.l.b16 %v693
        %v706 = vunpack.c.l.b16 %v694
        %v707 = vunpack.c.l.b16 %v695
        %v708 = vunpack.c.l.b16 %v696
        %v709 = vunpack.c.l.b16 %v697
        %v710 = vpack.c.b16 %v705, %v704
        %v711 = vpack.c.b16 %v707, %v706
        %v712 = vpack.c.b16 %v709, %v708
        %v714 = vsel %vm556, %v710, 0
        %v717 = vsel %vm556, %v711, 0
        %v720 = vsel %vm556, %v712, 0
        %722 = vmatprep.subr.bf16.mxu0 0
        %723 = vmatpush1.bf16.msra.mxu0 %v690
        %724 = vmatprep.subr.bf16.mxu0 0
        %725 = vmatpush1.bf16.msra.mxu0 0
        %726 = vmatprep.subr.bf16.mxu0 0
        %727 = vmatpush1.bf16.msra.mxu0 0
        %728 = vmatprep.subr.bf16.mxu0 0
        %729 = vmatpush1.bf16.msra.mxu0 0
        %730 = vmatprep.subr.bf16.mxu0 0
        %731 = vmatpush1.bf16.msra.mxu0 0
        %732 = vmatprep.subr.bf16.mxu0 0
        %733 = vmatpush1.bf16.msra.mxu0 0
        %734 = vmatprep.subr.bf16.mxu0 0
        %735 = vmatpush1.bf16.msra.mxu0 0
        %736 = vmatprep.subr.bf16.mxu0 0
        %737 = vmatpush1.bf16.msra.mxu0 0
        %738 = vmatprep.subr.bf16.mxu0 0
        %739 = vmatpush1.bf16.msra.mxu0 0
        %740 = vmatprep.subr.bf16.mxu0 0
        %741 = vmatpush1.bf16.msra.mxu0 0
        %742 = vmatprep.subr.bf16.mxu0 0
        %743 = vmatpush1.bf16.msra.mxu0 0
        %744 = vmatprep.subr.bf16.mxu0 0
        %745 = vmatpush1.bf16.msra.mxu0 0
        %746 = vmatprep.subr.bf16.mxu0 0
        %747 = vmatpush1.bf16.msra.mxu0 0
        %748 = vmatprep.subr.bf16.mxu0 0
        %749 = vmatpush1.bf16.msra.mxu0 0
        %750 = vmatprep.subr.bf16.mxu0 0
        %751 = vmatpush1.bf16.msra.mxu0 0
        %752 = vmatprep.subr.bf16.mxu0 0
        %753 = vmatpush1.bf16.msra.mxu0 0
        %754 = vmatprep.mubr.bf16.mxu0 0
        %755 = vmatmul.mubr.bf16.gmra.mrb[0].mxu0 %v714
        %v756 = vpop.f32.mrb[0].mxu0
        %v757 = vadd.f32 0.0, %v756
        %v758 = vpop.f32.mrb[0].mxu0
        %v759 = vpop.f32.mrb[0].mxu0
        %v760 = vadd.f32 0.0, %v759
        %v761 = vpop.f32.mrb[0].mxu0
        %762 = vmatprep.mubr.bf16.mxu0 0
        %763 = vmatmul.mubr.bf16.gmra.mrb[0].mxu0 %v717
        %v764 = vpop.f32.mrb[0].mxu0
        %v765 = vadd.f32 0.0, %v764
        %v766 = vpop.f32.mrb[0].mxu0
        %v767 = vpop.f32.mrb[0].mxu0
        %v768 = vadd.f32 0.0, %v767
        %v769 = vpop.f32.mrb[0].mxu0
        %770 = vmatprep.mubr.bf16.mxu0 0
        %771 = vmatmul.mubr.bf16.gmra.mrb[0].mxu0 %v720
        %v772 = vpop.f32.mrb[0].mxu0
        %v773 = vadd.f32 0.0, %v772
        %v774 = vpop.f32.mrb[0].mxu0
        %v775 = vpop.f32.mrb[0].mxu0
        %v776 = vadd.f32 0.0, %v775
        %v777 = vpop.f32.mrb[0].mxu0
        %778 = vdwg.mxu0
        // Predicated region
        $region85: #{tpu_custom_call.1} parent=75 // pred_check
          %p779 = pneg %p528
        $region86: #{tpu_custom_call.1} parent=75 // pred_check_branch
          %781 = sbr.rel (%p779) target = $region88
        $region87: #{tpu_custom_call.1} parent=75 // pred_region
          %v782 = vld [vmem:[%s521] sm:$0xf]
          %v783 = vld [vmem:[%s521 + $0x4] sm:$0xf]
          %v786 = vunpack.c.l.b16 %v782
          %v787 = vunpack.c.l.b16 %v783
          %v788 = vpack.c.b16 %v787, %v786
          %v790 = vsel %vm556, %v788, 0
          %792 = vmatprep.subr.bf16.mxu0 0
          %793 = vmatpush1.bf16.msra.mxu0 %v603
          %794 = vmatprep.subr.bf16.mxu0 0
          %795 = vmatpush1.bf16.msra.mxu0 0
          %796 = vmatprep.subr.bf16.mxu0 0
          %797 = vmatpush1.bf16.msra.mxu0 0
          %798 = vmatprep.subr.bf16.mxu0 0
          %799 = vmatpush1.bf16.msra.mxu0 0
          %800 = vmatprep.subr.bf16.mxu0 0
          %801 = vmatpush1.bf16.msra.mxu0 0
          %802 = vmatprep.subr.bf16.mxu0 0
          %803 = vmatpush1.bf16.msra.mxu0 0
          %804 = vmatprep.subr.bf16.mxu0 0
          %805 = vmatpush1.bf16.msra.mxu0 0
          %806 = vmatprep.subr.bf16.mxu0 0
          %807 = vmatpush1.bf16.msra.mxu0 0
          %808 = vmatprep.subr.bf16.mxu0 0
          %809 = vmatpush1.bf16.msra.mxu0 0
          %810 = vmatprep.subr.bf16.mxu0 0
          %811 = vmatpush1.bf16.msra.mxu0 0
          %812 = vmatprep.subr.bf16.mxu0 0
          %813 = vmatpush1.bf16.msra.mxu0 0
          %814 = vmatprep.subr.bf16.mxu0 0
          %815 = vmatpush1.bf16.msra.mxu0 0
          %816 = vmatprep.subr.bf16.mxu0 0
          %817 = vmatpush1.bf16.msra.mxu0 0
          %818 = vmatprep.subr.bf16.mxu0 0
          %819 = vmatpush1.bf16.msra.mxu0 0
          %820 = vmatprep.subr.bf16.mxu0 0
          %821 = vmatpush1.bf16.msra.mxu0 0
          %822 = vmatprep.subr.bf16.mxu0 0
          %823 = vmatpush1.bf16.msra.mxu0 0
          %824 = vmatprep.mubr.bf16.mxu0 0
          %825 = vmatmul.mubr.bf16.gmra.mrb[0].mxu0 %v790
          %v826 = vpop.f32.mrb[0].mxu0
          %v827 = vadd.f32 0.0, %v826
          %v828 = vpop.f32.mrb[0].mxu0
          %v829 = vpop.f32.mrb[0].mxu0
          %v830 = vadd.f32 0.0, %v829
          %v831 = vpop.f32.mrb[0].mxu0
          %832 = vdwg.mxu0
          %v833 = vsel %vm608, %v827, 0.0
          %v834 = vsel %vm608, %v830, 0.0
          %v835 = vpack.c.bf16 %v834, %v833
          %v837 = vunpack.c.l.b16 %v835
          %v838 = vunpack.c.h.b16 %v835
          %v839 = vpack.c.b16 %v837, %v837
          %v840 = vpack.c.b16 %v838, %v838
          %843 = vst [vmem:[#allocation6] sm:$0xf] %v839
          %844 = vst [vmem:[#allocation6 + $0x4] sm:$0xf] %v840
        $region88: #{tpu_custom_call.1} parent=75 // pred_fallthru
          _
        %v845 = vpack.c.bf16 %v768, %v765
        %v846 = vld [vmem:[%s5] sm:$0xf]
        %v847 = vld [vmem:[%s5 + $0x4] sm:$0xf]
        %v848 = vld [vmem:[%s5 + $0x8] sm:$0xf]
        %v849 = vld [vmem:[%s5 + $0xc] sm:$0xf]
        %v850 = vpack.c.bf16 %v776, %v773
        %v851 = vld [vmem:[%s6] sm:$0xf]
        %v852 = vld [vmem:[%s6 + $0x4] sm:$0xf]
        %v853 = vld [vmem:[%s6 + $0x8] sm:$0xf]
        %v854 = vld [vmem:[%s6 + $0xc] sm:$0xf]
        %v859 = vunpack.c.l.b16 %v851
        %v860 = vunpack.c.l.b16 %v852
        %v861 = vunpack.c.l.b16 %v853
        %v862 = vunpack.c.l.b16 %v854
        %v863 = vpack.c.b16 %v860, %v859
        %v864 = vpack.c.b16 %v862, %v861
        %v868 = vsel %vm608, %v850, 0
        %870 = vmatprep.subr.bf16.mxu0 0
        %871 = vmatpush1.bf16.msra.mxu0 %v863
        %872 = vmatprep.subr.bf16.mxu0 0
        %873 = vmatpush1.bf16.msra.mxu0 %v864
        %874 = vmatprep.subr.bf16.mxu0 0
        %875 = vmatpush1.bf16.msra.mxu0 0
        %876 = vmatprep.subr.bf16.mxu0 0
        %877 = vmatpush1.bf16.msra.mxu0 0
        %878 = vmatprep.subr.bf16.mxu0 0
        %879 = vmatpush1.bf16.msra.mxu0 0
        %880 = vmatprep.subr.bf16.mxu0 0
        %881 = vmatpush1.bf16.msra.mxu0 0
        %882 = vmatprep.subr.bf16.mxu0 0
        %883 = vmatpush1.bf16.msra.mxu0 0
        %884 = vmatprep.subr.bf16.mxu0 0
        %885 = vmatpush1.bf16.msra.mxu0 0
        %886 = vmatprep.subr.bf16.mxu0 0
        %887 = vmatpush1.bf16.msra.mxu0 0
        %888 = vmatprep.subr.bf16.mxu0 0
        %889 = vmatpush1.bf16.msra.mxu0 0
        %890 = vmatprep.subr.bf16.mxu0 0
        %891 = vmatpush1.bf16.msra.mxu0 0
        %892 = vmatprep.subr.bf16.mxu0 0
        %893 = vmatpush1.bf16.msra.mxu0 0
        %894 = vmatprep.subr.bf16.mxu0 0
        %895 = vmatpush1.bf16.msra.mxu0 0
        %896 = vmatprep.subr.bf16.mxu0 0
        %897 = vmatpush1.bf16.msra.mxu0 0
        %898 = vmatprep.subr.bf16.mxu0 0
        %899 = vmatpush1.bf16.msra.mxu0 0
        %900 = vmatprep.subr.bf16.mxu0 0
        %901 = vmatpush1.bf16.msra.mxu0 0
        %902 = vmatprep.mubr.bf16.mxu0 0
        %903 = vmatmul.mubr.bf16.gmra.mrb[0].mxu0 %v868
        %v904 = vpop.f32.mrb[0].mxu0
        %v905 = vadd.f32 0.0, %v904
        %v906 = vpop.f32.mrb[0].mxu0
        %v907 = vpop.f32.mrb[0].mxu0
        %v908 = vadd.f32 0.0, %v907
        %v909 = vpop.f32.mrb[0].mxu0
        %910 = vdwg.mxu0
        %v915 = vunpack.c.l.b16 %v846
        %v916 = vunpack.c.l.b16 %v847
        %v917 = vunpack.c.l.b16 %v848
        %v918 = vunpack.c.l.b16 %v849
        %v919 = vpack.c.b16 %v916, %v915
        %v920 = vpack.c.b16 %v918, %v917
        %v924 = vsel %vm608, %v845, 0
        %926 = vmatprep.subr.bf16.mxu0 0
        %927 = vmatpush1.bf16.msra.mxu0 %v919
        %928 = vmatprep.subr.bf16.mxu0 0
        %929 = vmatpush1.bf16.msra.mxu0 %v920
        %930 = vmatprep.subr.bf16.mxu0 0
        %931 = vmatpush1.bf16.msra.mxu0 0
        %932 = vmatprep.subr.bf16.mxu0 0
        %933 = vmatpush1.bf16.msra.mxu0 0
        %934 = vmatprep.subr.bf16.mxu0 0
        %935 = vmatpush1.bf16.msra.mxu0 0
        %936 = vmatprep.subr.bf16.mxu0 0
        %937 = vmatpush1.bf16.msra.mxu0 0
        %938 = vmatprep.subr.bf16.mxu0 0
        %939 = vmatpush1.bf16.msra.mxu0 0
        %940 = vmatprep.subr.bf16.mxu0 0
        %941 = vmatpush1.bf16.msra.mxu0 0
        %942 = vmatprep.subr.bf16.mxu0 0
        %943 = vmatpush1.bf16.msra.mxu0 0
        %944 = vmatprep.subr.bf16.mxu0 0
        %945 = vmatpush1.bf16.msra.mxu0 0
        %946 = vmatprep.subr.bf16.mxu0 0
        %947 = vmatpush1.bf16.msra.mxu0 0
        %948 = vmatprep.subr.bf16.mxu0 0
        %949 = vmatpush1.bf16.msra.mxu0 0
        %950 = vmatprep.subr.bf16.mxu0 0
        %951 = vmatpush1.bf16.msra.mxu0 0
        %952 = vmatprep.subr.bf16.mxu0 0
        %953 = vmatpush1.bf16.msra.mxu0 0
        %954 = vmatprep.subr.bf16.mxu0 0
        %955 = vmatpush1.bf16.msra.mxu0 0
        %956 = vmatprep.subr.bf16.mxu0 0
        %957 = vmatpush1.bf16.msra.mxu0 0
        %958 = vmatprep.mubr.bf16.mxu0 0
        %959 = vmatmul.mubr.bf16.gmra.mrb[0].mxu0 %v924
        %v960 = vpop.f32.mrb[0].mxu0
        %v961 = vadd.f32 %v905, %v960
        %v962 = vpop.f32.mrb[0].mxu0
        %v963 = vpop.f32.mrb[0].mxu0
        %v964 = vadd.f32 %v908, %v963
        %v965 = vpop.f32.mrb[0].mxu0
        %966 = vdwg.mxu0
        %v967 = vld [vmem:[%s7] sm:$0x1]
        %v969 = vlaneseq
        %v970 = vshrl.u32 %v969, 7
        %v971 = vsub.s32 0, %v970
        %v972 = vrot.slane %v967, %v971
        %v974 = vadd.f32 %v961, %v972
        %v975 = vadd.f32 %v964, %v972
        %v976 = vmax.f32 %v974, 0.0
        %v977 = vmax.f32 %v975, 0.0
        %v978 = vpack.c.bf16 %v977, %v976
        %v979 = vld [vmem:[%s8] sm:$0xf]
        %v980 = vld [vmem:[%s8 + $0x4] sm:$0xf]
        %v981 = vld [vmem:[%s8 + $0x8] sm:$0xf]
        %v982 = vld [vmem:[%s8 + $0xc] sm:$0xf]
        %v983 = vld [vmem:[%s9] sm:$0x1]
        %v985 = vlaneseq
        %v986 = vshrl.u32 %v985, 7
        %v987 = vsub.s32 0, %v986
        %v988 = vrot.slane %v983, %v987
        %v994 = vunpack.c.l.b16 %v979
        %v995 = vunpack.c.l.b16 %v980
        %v996 = vunpack.c.l.b16 %v981
        %v997 = vunpack.c.l.b16 %v982
        %v998 = vpack.c.b16 %v995, %v994
        %v999 = vpack.c.b16 %v997, %v996
        %v1003 = vsel %vm608, %v978, 0
        %1005 = vmatprep.subr.bf16.mxu0 0
        %1006 = vmatpush1.bf16.msra.mxu0 %v998
        %1007 = vmatprep.subr.bf16.mxu0 0
        %1008 = vmatpush1.bf16.msra.mxu0 %v999
        %1009 = vmatprep.subr.bf16.mxu0 0
        %1010 = vmatpush1.bf16.msra.mxu0 0
        %1011 = vmatprep.subr.bf16.mxu0 0
        %1012 = vmatpush1.bf16.msra.mxu0 0
        %1013 = vmatprep.subr.bf16.mxu0 0
        %1014 = vmatpush1.bf16.msra.mxu0 0
        %1015 = vmatprep.subr.bf16.mxu0 0
        %1016 = vmatpush1.bf16.msra.mxu0 0
        %1017 = vmatprep.subr.bf16.mxu0 0
        %1018 = vmatpush1.bf16.msra.mxu0 0
        %1019 = vmatprep.subr.bf16.mxu0 0
        %1020 = vmatpush1.bf16.msra.mxu0 0
        %1021 = vmatprep.subr.bf16.mxu0 0
        %1022 = vmatpush1.bf16.msra.mxu0 0
        %1023 = vmatprep.subr.bf16.mxu0 0
        %1024 = vmatpush1.bf16.msra.mxu0 0
        %1025 = vmatprep.subr.bf16.mxu0 0
        %1026 = vmatpush1.bf16.msra.mxu0 0
        %1027 = vmatprep.subr.bf16.mxu0 0
        %1028 = vmatpush1.bf16.msra.mxu0 0
        %1029 = vmatprep.subr.bf16.mxu0 0
        %1030 = vmatpush1.bf16.msra.mxu0 0
        %1031 = vmatprep.subr.bf16.mxu0 0
        %1032 = vmatpush1.bf16.msra.mxu0 0
        %1033 = vmatprep.subr.bf16.mxu0 0
        %1034 = vmatpush1.bf16.msra.mxu0 0
        %1035 = vmatprep.subr.bf16.mxu0 0
        %1036 = vmatpush1.bf16.msra.mxu0 0
        %1037 = vmatprep.mubr.bf16.mxu0 0
        %1038 = vmatmul.mubr.bf16.gmra.mrb[0].mxu0 %v1003
        %v1039 = vpop.f32.mrb[0].mxu0
        %v1040 = vadd.f32 %v988, %v1039
        %v1041 = vpop.f32.mrb[0].mxu0
        %v1042 = vpop.f32.mrb[0].mxu0
        %v1043 = vadd.f32 %v988, %v1042
        %v1044 = vpop.f32.mrb[0].mxu0
        %1045 = vdwg.mxu0
        %v1046 = vpack.c.bf16 %v760, %v757
        %v1047 = vld [vmem:[%s10] sm:$0xf]
        %v1048 = vld [vmem:[%s10 + $0x4] sm:$0xf]
        %v1049 = vld [vmem:[%s10 + $0x8] sm:$0xf]
        %v1050 = vld [vmem:[%s10 + $0xc] sm:$0xf]
        %v1051 = vld [vmem:[%s11] sm:$0x1]
        %v1053 = vlaneseq
        %v1054 = vshrl.u32 %v1053, 7
        %v1055 = vsub.s32 0, %v1054
        %v1056 = vrot.slane %v1051, %v1055
        %v1062 = vunpack.c.l.b16 %v1047
        %v1063 = vunpack.c.l.b16 %v1048
        %v1064 = vunpack.c.l.b16 %v1049
        %v1065 = vunpack.c.l.b16 %v1050
        %v1066 = vpack.c.b16 %v1063, %v1062
        %v1067 = vpack.c.b16 %v1065, %v1064
        %v1071 = vsel %vm608, %v690, 0
        %v1074 = vsel %vm608, %v1046, 0
        %1076 = vmatprep.subr.bf16.mxu0 0
        %1077 = vmatpush1.bf16.msra.mxu0 %v1066
        %1078 = vmatprep.subr.bf16.mxu0 0
        %1079 = vmatpush1.bf16.msra.mxu0 %v1067
        %1080 = vmatprep.subr.bf16.mxu0 0
        %1081 = vmatpush1.bf16.msra.mxu0 0
        %1082 = vmatprep.subr.bf16.mxu0 0
        %1083 = vmatpush1.bf16.msra.mxu0 0
        %1084 = vmatprep.subr.bf16.mxu0 0
        %1085 = vmatpush1.bf16.msra.mxu0 0
        %1086 = vmatprep.subr.bf16.mxu0 0
        %1087 = vmatpush1.bf16.msra.mxu0 0
        %1088 = vmatprep.subr.bf16.mxu0 0
        %1089 = vmatpush1.bf16.msra.mxu0 0
        %1090 = vmatprep.subr.bf16.mxu0 0
        %1091 = vmatpush1.bf16.msra.mxu0 0
        %1092 = vmatprep.subr.bf16.mxu0 0
        %1093 = vmatpush1.bf16.msra.mxu0 0
        %1094 = vmatprep.subr.bf16.mxu0 0
        %1095 = vmatpush1.bf16.msra.mxu0 0
        %1096 = vmatprep.subr.bf16.mxu0 0
        %1097 = vmatpush1.bf16.msra.mxu0 0
        %1098 = vmatprep.subr.bf16.mxu0 0
        %1099 = vmatpush1.bf16.msra.mxu0 0
        %1100 = vmatprep.subr.bf16.mxu0 0
        %1101 = vmatpush1.bf16.msra.mxu0 0
        %1102 = vmatprep.subr.bf16.mxu0 0
        %1103 = vmatpush1.bf16.msra.mxu0 0
        %1104 = vmatprep.subr.bf16.mxu0 0
        %1105 = vmatpush1.bf16.msra.mxu0 0
        %1106 = vmatprep.subr.bf16.mxu0 0
        %1107 = vmatpush1.bf16.msra.mxu0 0
        %1108 = vmatprep.mubr.bf16.mxu0 0
        %1109 = vmatmul.mubr.bf16.gmra.mrb[0].mxu0 %v1071
        %v1110 = vpop.f32.mrb[0].mxu0
        %v1111 = vadd.f32 %v1056, %v1110
        %v1112 = vpop.f32.mrb[0].mxu0
        %v1113 = vpop.f32.mrb[0].mxu0
        %v1114 = vadd.f32 %v1056, %v1113
        %v1115 = vpop.f32.mrb[0].mxu0
        %1116 = vmatprep.mubr.bf16.mxu0 0
        %1117 = vmatmul.mubr.bf16.gmra.mrb[0].mxu0 %v1074
        %v1118 = vpop.f32.mrb[0].mxu0
        %v1119 = vadd.f32 %v1056, %v1118
        %v1120 = vpop.f32.mrb[0].mxu0
        %v1121 = vpop.f32.mrb[0].mxu0
        %v1122 = vadd.f32 %v1056, %v1121
        %v1123 = vpop.f32.mrb[0].mxu0
        %1124 = vdwg.mxu0
        %v1125 = vmax.f32 %v1111, 0.0
        %v1126 = vmax.f32 %v1114, 0.0
        %v1127 = vmax.f32 %v1119, 0.0
        %v1128 = vmax.f32 %v1122, 0.0
        %v1129 = vpack.c.bf16 %v1126, %v1125
        %v1130 = vpack.c.bf16 %v1128, %v1127
        %v1131 = vld [vmem:[%s12] sm:$0xf]
        %v1132 = vld [vmem:[%s12 + $0x4] sm:$0xf]
        %v1133 = vld [vmem:[%s12 + $0x8] sm:$0xf]
        %v1134 = vld [vmem:[%s12 + $0xc] sm:$0xf]
        %v1135 = vld [vmem:[%s12 + $0x10] sm:$0xf]
        %v1136 = vld [vmem:[%s12 + $0x14] sm:$0xf]
        %v1137 = vld [vmem:[%s12 + $0x18] sm:$0xf]
        %v1138 = vld [vmem:[%s12 + $0x1c] sm:$0xf]
        %v1139 = vld [vmem:[%s13] sm:$0x1]
        %v1141 = vlaneseq
        %v1142 = vshrl.u32 %v1141, 7
        %v1143 = vsub.s32 0, %v1142
        %v1144 = vrot.slane %v1139, %v1143
        %v1154 = vunpack.c.l.b16 %v1131
        %v1155 = vunpack.c.l.b16 %v1132
        %v1156 = vunpack.c.l.b16 %v1133
        %v1157 = vunpack.c.l.b16 %v1134
        %v1158 = vunpack.c.l.b16 %v1135
        %v1159 = vunpack.c.l.b16 %v1136
        %v1160 = vunpack.c.l.b16 %v1137
        %v1161 = vunpack.c.l.b16 %v1138
        %v1162 = vpack.c.b16 %v1155, %v1154
        %v1163 = vpack.c.b16 %v1157, %v1156
        %v1164 = vpack.c.b16 %v1159, %v1158
        %v1165 = vpack.c.b16 %v1161, %v1160
        %v1171 = vsel %vm644, %v1129, 0
        %v1174 = vsel %vm644, %v1130, 0
        %1176 = vmatprep.subr.bf16.mxu0 0
        %1177 = vmatpush1.bf16.msra.mxu0 %v1162
        %1178 = vmatprep.subr.bf16.mxu0 0
        %1179 = vmatpush1.bf16.msra.mxu0 %v1163
        %1180 = vmatprep.subr.bf16.mxu0 0
        %1181 = vmatpush1.bf16.msra.mxu0 %v1164
        %1182 = vmatprep.subr.bf16.mxu0 0
        %1183 = vmatpush1.bf16.msra.mxu0 %v1165
        %1184 = vmatprep.subr.bf16.mxu0 0
        %1185 = vmatpush1.bf16.msra.mxu0 0
        %1186 = vmatprep.subr.bf16.mxu0 0
        %1187 = vmatpush1.bf16.msra.mxu0 0
        %1188 = vmatprep.subr.bf16.mxu0 0
        %1189 = vmatpush1.bf16.msra.mxu0 0
        %1190 = vmatprep.subr.bf16.mxu0 0
        %1191 = vmatpush1.bf16.msra.mxu0 0
        %1192 = vmatprep.subr.bf16.mxu0 0
        %1193 = vmatpush1.bf16.msra.mxu0 0
        %1194 = vmatprep.subr.bf16.mxu0 0
        %1195 = vmatpush1.bf16.msra.mxu0 0
        %1196 = vmatprep.subr.bf16.mxu0 0
        %1197 = vmatpush1.bf16.msra.mxu0 0
        %1198 = vmatprep.subr.bf16.mxu0 0
        %1199 = vmatpush1.bf16.msra.mxu0 0
        %1200 = vmatprep.subr.bf16.mxu0 0
        %1201 = vmatpush1.bf16.msra.mxu0 0
        %1202 = vmatprep.subr.bf16.mxu0 0
        %1203 = vmatpush1.bf16.msra.mxu0 0
        %1204 = vmatprep.subr.bf16.mxu0 0
        %1205 = vmatpush1.bf16.msra.mxu0 0
        %1206 = vmatprep.subr.bf16.mxu0 0
        %1207 = vmatpush1.bf16.msra.mxu0 0
        %1208 = vmatprep.mubr.bf16.mxu0 0
        %1209 = vmatmul.mubr.bf16.gmra.mrb[0].mxu0 %v1171
        %v1210 = vpop.f32.mrb[0].mxu0
        %v1211 = vadd.f32 %v1144, %v1210
        %v1212 = vpop.f32.mrb[0].mxu0
        %v1213 = vpop.f32.mrb[0].mxu0
        %v1214 = vadd.f32 %v1144, %v1213
        %v1215 = vpop.f32.mrb[0].mxu0
        %1216 = vmatprep.mubr.bf16.mxu0 0
        %1217 = vmatmul.mubr.bf16.gmra.mrb[0].mxu0 %v1174
        %v1218 = vpop.f32.mrb[0].mxu0
        %v1219 = vadd.f32 %v1144, %v1218
        %v1220 = vpop.f32.mrb[0].mxu0
        %v1221 = vpop.f32.mrb[0].mxu0
        %v1222 = vadd.f32 %v1144, %v1221
        %v1223 = vpop.f32.mrb[0].mxu0
        %1224 = vdwg.mxu0
        %v1225 = vpack.c.bf16 %v1043, %v1040
        %v1227 = vunpack.c.l.b16 %v1225
        %v1228 = vunpack.c.h.b16 %v1225
        %v1229 = vpack.c.b16 %v1227, %v1227
        %v1230 = vpack.c.b16 %v1228, %v1228
        %1233 = vst [vmem:[%s516] sm:$0xf] %v1229
        %1234 = vst [vmem:[%s516 + $0x4] sm:$0xf] %v1230
        %v1235 = vpack.c.bf16 %v1214, %v1211
        %v1236 = vpack.c.bf16 %v1222, %v1219
        %v1239 = vunpack.c.l.b16 %v1235
        %v1240 = vunpack.c.h.b16 %v1235
        %v1241 = vunpack.c.l.b16 %v1236
        %v1242 = vunpack.c.h.b16 %v1236
        %v1243 = vpack.c.b16 %v1239, %v1239
        %v1244 = vpack.c.b16 %v1240, %v1240
        %v1245 = vpack.c.b16 %v1241, %v1241
        %v1246 = vpack.c.b16 %v1242, %v1242
        %1251 = vst [vmem:[%s516 + $0x8] sm:$0xf] %v1243
        %1252 = vst [vmem:[%s516 + $0xc] sm:$0xf] %v1244
        %1253 = vst [vmem:[%s516 + $0x10] sm:$0xf] %v1245
        %1254 = vst [vmem:[%s516 + $0x14] sm:$0xf] %v1246
        %s1255 = sand.u32 %s365, 1
        %s1256 = scalar_lea.sflag [#allocation8], %s1255
        %s1257 = sand.u32 %s365, 1
        %s1258 = smul.addr %s1257, 24
        %s1259 = scalar_lea.vmem [#allocation7], %s1258
        // Predicated region
        $region89: #{tpu_custom_call.1} parent=75 // pred_check
          %p1260 = pneg %p349
        $region90: #{tpu_custom_call.1} parent=75 // pred_check_branch
          %1262 = sbr.rel (%p1260) target = $region92
        $region91: #{tpu_custom_call.1} parent=75 // pred_region
          %s1264 = ssub.s32 128, 128
          %1265 = vsyncadd [#allocation5], %s1264
          %s1266 = sshll.u32 [#allocation6], 4
          %s1267 = int_to_ptr.vmem [resolvable:$true] %s1266
          %1272 = dma.vmem_to_hbm [thread:$0]  %s1267, 128, %s14, [#allocation5], 64, 64, 4
        $region92: #{tpu_custom_call.1} parent=75 // pred_fallthru
          _
        // Predicated region
        $region93: #{tpu_custom_call.1} parent=75 // pred_check
          %p1273 = pneg %p375
        $region94: #{tpu_custom_call.1} parent=75 // pred_check_branch
          %1275 = sbr.rel (%p1273) target = $region96
        $region95: #{tpu_custom_call.1} parent=75 // pred_region
          %s1277 = ssub.s32 384, 384
          %1278 = vsyncadd %s1256, %s1277
          %s1279 = smul.addr %s32, 6
          %s1280 = smul.addr %s1279, 64
          %s1281 = scalar_lea.hbm %s15, %s1280
          %s1282 = sshll.u32 %s1259, 4
          %s1283 = int_to_ptr.vmem [resolvable:$true] %s1282
          %1288 = dma.vmem_to_hbm [thread:$0]  %s1283, 384, %s1281, %s1256, 64, 64, 4
        $region96: #{tpu_custom_call.1} parent=75 // pred_fallthru
          _
        // Predicated region
        $region97: #{tpu_custom_call.1} parent=75 // pred_check
          %p1289 = pneg %p349
        $region98: #{tpu_custom_call.1} parent=75 // pred_check_branch
          %1291 = sbr.rel (%p1289) target = $region100
        $region99: #{tpu_custom_call.1} parent=75 // pred_region
          %1292 = dma.done [#allocation5], 128
        $region100: #{tpu_custom_call.1} parent=75 // pred_fallthru
          _
      $region76: #{tpu_custom_call.1} parent=5 // pred_fallthru
        _
      %p1293 = scmp.le.s32.totalorder 2, %s27
      // Predicated region
      $region101: #{tpu_custom_call.1} parent=5 // pred_check
        %p1294 = pneg %p1293
      $region102: #{tpu_custom_call.1} parent=5 // pred_check_branch
        %1296 = sbr.rel (%p1294) target = $region104
      $region103: #{tpu_custom_call.1} parent=5 // pred_region
        %s1297 = ssub.s32 %s27, 2
        // Predicated region
        $region105: #{tpu_custom_call.1} parent=103 // pred_check
          %p1298 = pneg %p381
        $region106: #{tpu_custom_call.1} parent=103 // pred_check_branch
          %1300 = sbr.rel (%p1298) target = $region108
        $region107: #{tpu_custom_call.1} parent=103 // pred_region
          %s1301 = sand.u32 %s366, 1
          %s1302 = scalar_lea.sflag [#allocation8], %s1301
          %s1303 = sand.u32 %s366, 1
          %s1304 = smul.addr %s1303, 24
          %s1305 = scalar_lea.vmem [#allocation7], %s1304
          %1306 = dma.done %s1302, 384
        $region108: #{tpu_custom_call.1} parent=103 // pred_fallthru
          _
      $region104: #{tpu_custom_call.1} parent=5 // pred_fallthru
        _
    $region6: #{tpu_custom_call.1} parent=1 // loop_footer
      %s31 = sadd.s32 1, %s27
    $region7: #{tpu_custom_call.1} parent=1 // loop_footer_branch
      %26 = sbr.rel target = $region3
    $region8: #{tpu_custom_call.1} parent=1 // loop_exit
      _
    %1307 = vsyncpa [#allocation4], 1
    %s1308 = scalar_lea.sflag [#allocation4], 1
    %1309 = vsyncpa %s1308, 1
    %1310 = vsyncpa [#allocation5], 1
    %s1311 = scalar_lea.sflag [#allocation5], 1
    %1312 = vsyncpa %s1311, 1
    %1313 = vsyncpa [#allocation8], 1
    %s1314 = scalar_lea.sflag [#allocation8], 1
    %1315 = vsyncpa %s1314, 1

</llo_original>
